<compile_context>
chip_gen: v5e
topology: v5e:2x2
jax: 0.10.0
libtpu: 0.0.40
codegen_flags: <defaults>
</compile_context>

<pallas_src>
import jax
import jax.numpy as jnp
from jax import lax
from jax.experimental import pallas as pl
from jax.experimental.pallas import tpu as pltpu


LAYERS = [(3, 4), (4, 8), (8, 16), (16, 16)]   # (Cin, Cout); all k=3, s=2, p=1
NEG_SLOPE = 0.2


# ----------------------------------------------------------------------------
# Fused Pallas kernel: all 4 conv+activation layers for one image.
#   ref order = (x_ref, c1, l1, b1, c2, l2, b2, c3, l3, b3, c4, l4, b4, o_ref)
#   x_ref : (1, W0, Cin0*H0)      bf16  activation^T (width on sublanes)
#   c_ref : (3, Wo, W)            bf16  stride-2 / pad-1 width selection per dx
#   l_ref : (3, Cin*H, Cout*Ho)   bf16  conv weights fused with height selection
#   b_ref : (1, Cout*Ho)          f32   bias repeated over ho (lane-dense row)
#   o_ref : (1, Wo4, Cout4*Ho4)   f32   final sigmoid output
# ----------------------------------------------------------------------------
def _disc_kernel(x_ref, *refs):
    o_ref = refs[-1]
    h = x_ref[0].astype(jnp.bfloat16)                       # (W, Cin*H)
    for li in range(4):
        c_ref = refs[3 * li]
        l_ref = refs[3 * li + 1]
        b_ref = refs[3 * li + 2]
        acc = None
        for dx in range(3):
            # width (stride-2 / zero-pad) selection — exact on bf16 values
            y = jnp.dot(c_ref[dx], h, preferred_element_type=jnp.float32)
            y = y.astype(jnp.bfloat16)                      # (Wo, Cin*H)
            # channel contraction + height selection + conv weights (MXU, f32 acc)
            p = jnp.dot(y, l_ref[dx], preferred_element_type=jnp.float32)
            acc = p if acc is None else acc + p             # (Wo, Cout*Ho) f32
        acc = acc + b_ref[...]                              # f32 epilogue
        if li < 3:
            acc = jnp.where(acc >= 0.0, acc, NEG_SLOPE * acc)   # LeakyReLU(0.2)
            h = acc.astype(jnp.bfloat16)                    # next layer's X^T
        else:
            o_ref[0] = jax.nn.sigmoid(acc)                  # final Sigmoid, f32


# ----------------------------------------------------------------------------
# Parameters (deterministic synthetic init matching the module shapes)
# ----------------------------------------------------------------------------
def init_params(key):
    params = []
    keys = jax.random.split(key, 2 * len(LAYERS))
    for i, (cin, cout) in enumerate(LAYERS):
        fan_in = float(cin * 9)
        w = jax.random.normal(keys[2 * i], (cout, cin, 3, 3), jnp.float32)
        w = w / jnp.sqrt(fan_in)
        b = 0.05 * jax.random.normal(keys[2 * i + 1], (cout,), jnp.float32)
        params.append((w, b))
    return params


def prepare_kernel_params(params, height, width):
    """Fold conv weights + stride-2/pad-1 geometry into GEMM operands (runs once)."""
    prep = []
    h, w = height, width
    for (wt, b) in params:
        cout, cin, _, _ = wt.shape
        ho, wo = h // 2, w // 2
        # width selection: cmats[dx, wo, w] = 1 iff w == 2*wo + dx - 1 (pad folded in)
        col = jnp.arange(w)[None, :]
        ocol = jnp.arange(wo)[:, None]
        cmats = jnp.stack(
            [(col == (2 * ocol + dx - 1)).astype(jnp.bfloat16) for dx in range(3)],
            axis=0)                                                     # (3, Wo, W)
        # height selection fused with conv weights:
        #   lmats[dx, ci*H + hh, co*Ho + ho] = wt[co, ci, dy, dx],  dy = hh - 2*ho + 1
        dy = jnp.arange(h)[None, :] - 2 * jnp.arange(ho)[:, None] + 1   # (Ho, H)
        valid = ((dy >= 0) & (dy < 3)).astype(jnp.float32)
        dy_c = jnp.clip(dy, 0, 2)
        lmats = []
        for dx in range(3):
            sel = wt[:, :, :, dx][:, :, dy_c] * valid[None, None]       # (Cout,Cin,Ho,H)
            lmats.append(jnp.transpose(sel, (1, 3, 0, 2)).reshape(cin * h, cout * ho))
        lmats = jnp.stack(lmats, axis=0).astype(jnp.bfloat16)           # (3, Cin*H, Cout*Ho)
        bias = jnp.repeat(b, ho)[None, :].astype(jnp.float32)           # (1, Cout*Ho)
        prep.append((cmats, lmats, bias))
        h, w = ho, wo
    return prep


# ----------------------------------------------------------------------------
# Forward pass (matches discremenator.forward): 1 pallas_call per batch
# ----------------------------------------------------------------------------
@jax.jit
def discriminator_forward(x_nchw, prep):
    n, c, h, w = x_nchw.shape
    # X^T layout: (N, W, Cin*H) — width on sublanes, channel*height on lanes.
    x_t = jnp.transpose(x_nchw, (0, 3, 1, 2)).reshape(n, w, c * h).astype(jnp.bfloat16)

    cout4 = LAYERS[-1][1]
    ho4, wo4 = h // 16, w // 16
    out_cols = cout4 * ho4

    in_specs = [pl.BlockSpec((1, w, c * h), lambda i: (i, 0, 0))]
    operands = [x_t]
    for (cm, lm, bm) in prep:
        in_specs.append(pl.BlockSpec(cm.shape, lambda i: (0, 0, 0)))    # resident weights
        in_specs.append(pl.BlockSpec(lm.shape, lambda i: (0, 0, 0)))
        in_specs.append(pl.BlockSpec(bm.shape, lambda i: (0, 0)))
        operands.extend([cm, lm, bm])

    out_t = pl.pallas_call(
        _disc_kernel,
        out_shape=jax.ShapeDtypeStruct((n, wo4, out_cols), jnp.float32),
        grid=(n,),
        in_specs=in_specs,
        out_specs=pl.BlockSpec((1, wo4, out_cols), lambda i: (i, 0, 0)),
        compiler_params=pltpu.CompilerParams(dimension_semantics=("parallel",)),
    )(*operands)

    # (N, Wo, Cout*Ho) -> NCHW (N, Cout, Ho, Wo)
    return jnp.transpose(out_t.reshape(n, wo4, cout4, ho4), (0, 2, 3, 1))


# ----------------------------------------------------------------------------
# Pure-JAX reference (f32 convs) for correctness checking
# ----------------------------------------------------------------------------
def reference_forward(x, params):
    h = x
    for i, (w, b) in enumerate(params):
        h = lax.conv_general_dilated(
            h, w, window_strides=(2, 2), padding=((1, 1), (1, 1)),
            dimension_numbers=("NCHW", "OIHW", "NCHW"))
        h = h + b[None, :, None, None]
        if i < 3:
            h = jnp.where(h >= 0.0, h, NEG_SLOPE * h)
        else:
            h = jax.nn.sigmoid(h)
    return h


if __name__ == "__main__":
    key = jax.random.PRNGKey(0)
    k_param, k_input = jax.random.split(key)
    params = init_params(k_param)
    prep = prepare_kernel_params(params, 64, 64)   # weight prep hoisted out of forward

    # 4 stride-2 convs: 64 -> 32 -> 16 -> 8 -> 4 spatial.
    x = jax.random.normal(k_input, (2, 3, 64, 64), jnp.float32)

    out = discriminator_forward(x, prep)
    out = jax.block_until_ready(out)

    assert out.shape == (2, 16, 4, 4), out.shape
    assert out.dtype == jnp.float32
    assert bool(jnp.all(jnp.isfinite(out)))
    assert bool(jnp.all((out >= 0.0) & (out <= 1.0)))   # sigmoid output range

    ref = reference_forward(x, params)
    max_err = float(jnp.max(jnp.abs(out - ref)))
    assert max_err < 5e-2, f"max abs err vs reference conv: {max_err}"
    print("KERNEL_OK")
</pallas_src>

<mosaic_0001>
module attributes {stable_mosaic.version = 11 : i64} {
  func.func @_disc_kernel(%arg0: i32, %arg1: memref<1x64x192xbf16, #tpu.memory_space<vmem>>, %arg2: memref<3x32x64xbf16, #tpu.memory_space<vmem>>, %arg3: memref<3x192x128xbf16, #tpu.memory_space<vmem>>, %arg4: memref<1x128xf32, #tpu.memory_space<vmem>>, %arg5: memref<3x16x32xbf16, #tpu.memory_space<vmem>>, %arg6: memref<3x128x128xbf16, #tpu.memory_space<vmem>>, %arg7: memref<1x128xf32, #tpu.memory_space<vmem>>, %arg8: memref<3x8x16xbf16, #tpu.memory_space<vmem>>, %arg9: memref<3x128x128xbf16, #tpu.memory_space<vmem>>, %arg10: memref<1x128xf32, #tpu.memory_space<vmem>>, %arg11: memref<3x4x8xbf16, #tpu.memory_space<vmem>>, %arg12: memref<3x128x64xbf16, #tpu.memory_space<vmem>>, %arg13: memref<1x64xf32, #tpu.memory_space<vmem>>, %arg14: memref<1x4x64xf32, #tpu.memory_space<vmem>>) attributes {dimension_semantics = [#tpu.dimension_semantics<parallel>], iteration_bounds = array<i64: 2>, scalar_prefetch = 0 : i64, scratch_operands = 0 : i64, tpu.core_type = #tpu.core_type<tc>, window_params = [{transform_indices = @transform_0, window_bounds = array<i64: 1, 64, 192>}, {pipeline_mode = #tpu.pipeline_mode<synchronous>, transform_indices = @transform_1, window_bounds = array<i64: 3, 32, 64>}, {pipeline_mode = #tpu.pipeline_mode<synchronous>, transform_indices = @transform_2, window_bounds = array<i64: 3, 192, 128>}, {pipeline_mode = #tpu.pipeline_mode<synchronous>, transform_indices = @transform_3, window_bounds = array<i64: 1, 128>}, {pipeline_mode = #tpu.pipeline_mode<synchronous>, transform_indices = @transform_4, window_bounds = array<i64: 3, 16, 32>}, {pipeline_mode = #tpu.pipeline_mode<synchronous>, transform_indices = @transform_5, window_bounds = array<i64: 3, 128, 128>}, {pipeline_mode = #tpu.pipeline_mode<synchronous>, transform_indices = @transform_6, window_bounds = array<i64: 1, 128>}, {pipeline_mode = #tpu.pipeline_mode<synchronous>, transform_indices = @transform_7, window_bounds = array<i64: 3, 8, 16>}, {pipeline_mode = #tpu.pipeline_mode<synchronous>, transform_indices = @transform_8, window_bounds = array<i64: 3, 128, 128>}, {pipeline_mode = #tpu.pipeline_mode<synchronous>, transform_indices = @transform_9, window_bounds = array<i64: 1, 128>}, {pipeline_mode = #tpu.pipeline_mode<synchronous>, transform_indices = @transform_10, window_bounds = array<i64: 3, 4, 8>}, {pipeline_mode = #tpu.pipeline_mode<synchronous>, transform_indices = @transform_11, window_bounds = array<i64: 3, 128, 64>}, {pipeline_mode = #tpu.pipeline_mode<synchronous>, transform_indices = @transform_12, window_bounds = array<i64: 1, 64>}, {transform_indices = @transform_13, window_bounds = array<i64: 1, 4, 64>}]} {
    %c0 = arith.constant 0 : index
    %c0_0 = arith.constant 0 : index
    %c0_1 = arith.constant 0 : index
    %0 = vector.load %arg1[%c0, %c0_0, %c0_1] : memref<1x64x192xbf16, #tpu.memory_space<vmem>>, vector<1x64x192xbf16>
    %1 = vector.shape_cast %0 : vector<1x64x192xbf16> to vector<64x192xbf16>
    %c0_2 = arith.constant 0 : index
    %c0_3 = arith.constant 0 : index
    %c0_4 = arith.constant 0 : index
    %2 = vector.load %arg2[%c0_2, %c0_3, %c0_4] : memref<3x32x64xbf16, #tpu.memory_space<vmem>>, vector<1x32x64xbf16>
    %3 = vector.shape_cast %2 : vector<1x32x64xbf16> to vector<32x64xbf16>
    %cst = arith.constant dense<0.000000e+00> : vector<32x192xf32>
    %4 = tpu.matmul %3, %1, %cst {dimension_numbers = #tpu.dot_dimension_numbers<[1], [0], [0], [1], [0, 0, 1, 1], [], []>} : vector<32x64xbf16>, vector<64x192xbf16>, vector<32x192xf32> -> vector<32x192xf32>
    %5 = arith.truncf %4 : vector<32x192xf32> to vector<32x192xbf16>
    %c0_5 = arith.constant 0 : index
    %c0_6 = arith.constant 0 : index
    %c0_7 = arith.constant 0 : index
    %6 = vector.load %arg3[%c0_5, %c0_6, %c0_7] : memref<3x192x128xbf16, #tpu.memory_space<vmem>>, vector<1x192x128xbf16>
    %7 = vector.shape_cast %6 : vector<1x192x128xbf16> to vector<192x128xbf16>
    %cst_8 = arith.constant dense<0.000000e+00> : vector<32x128xf32>
    %8 = tpu.matmul %5, %7, %cst_8 {dimension_numbers = #tpu.dot_dimension_numbers<[1], [0], [0], [1], [0, 0, 1, 1], [], []>} : vector<32x192xbf16>, vector<192x128xbf16>, vector<32x128xf32> -> vector<32x128xf32>
    %c1 = arith.constant 1 : index
    %c0_9 = arith.constant 0 : index
    %c0_10 = arith.constant 0 : index
    %9 = vector.load %arg2[%c1, %c0_9, %c0_10] : memref<3x32x64xbf16, #tpu.memory_space<vmem>>, vector<1x32x64xbf16>
    %10 = vector.shape_cast %9 : vector<1x32x64xbf16> to vector<32x64xbf16>
    %cst_11 = arith.constant dense<0.000000e+00> : vector<32x192xf32>
    %11 = tpu.matmul %10, %1, %cst_11 {dimension_numbers = #tpu.dot_dimension_numbers<[1], [0], [0], [1], [0, 0, 1, 1], [], []>} : vector<32x64xbf16>, vector<64x192xbf16>, vector<32x192xf32> -> vector<32x192xf32>
    %12 = arith.truncf %11 : vector<32x192xf32> to vector<32x192xbf16>
    %c1_12 = arith.constant 1 : index
    %c0_13 = arith.constant 0 : index
    %c0_14 = arith.constant 0 : index
    %13 = vector.load %arg3[%c1_12, %c0_13, %c0_14] : memref<3x192x128xbf16, #tpu.memory_space<vmem>>, vector<1x192x128xbf16>
    %14 = vector.shape_cast %13 : vector<1x192x128xbf16> to vector<192x128xbf16>
    %cst_15 = arith.constant dense<0.000000e+00> : vector<32x128xf32>
    %15 = tpu.matmul %12, %14, %cst_15 {dimension_numbers = #tpu.dot_dimension_numbers<[1], [0], [0], [1], [0, 0, 1, 1], [], []>} : vector<32x192xbf16>, vector<192x128xbf16>, vector<32x128xf32> -> vector<32x128xf32>
    %16 = arith.addf %8, %15 : vector<32x128xf32>
    %c2 = arith.constant 2 : index
    %c0_16 = arith.constant 0 : index
    %c0_17 = arith.constant 0 : index
    %17 = vector.load %arg2[%c2, %c0_16, %c0_17] : memref<3x32x64xbf16, #tpu.memory_space<vmem>>, vector<1x32x64xbf16>
    %18 = vector.shape_cast %17 : vector<1x32x64xbf16> to vector<32x64xbf16>
    %cst_18 = arith.constant dense<0.000000e+00> : vector<32x192xf32>
    %19 = tpu.matmul %18, %1, %cst_18 {dimension_numbers = #tpu.dot_dimension_numbers<[1], [0], [0], [1], [0, 0, 1, 1], [], []>} : vector<32x64xbf16>, vector<64x192xbf16>, vector<32x192xf32> -> vector<32x192xf32>
    %20 = arith.truncf %19 : vector<32x192xf32> to vector<32x192xbf16>
    %c2_19 = arith.constant 2 : index
    %c0_20 = arith.constant 0 : index
    %c0_21 = arith.constant 0 : index
    %21 = vector.load %arg3[%c2_19, %c0_20, %c0_21] : memref<3x192x128xbf16, #tpu.memory_space<vmem>>, vector<1x192x128xbf16>
    %22 = vector.shape_cast %21 : vector<1x192x128xbf16> to vector<192x128xbf16>
    %cst_22 = arith.constant dense<0.000000e+00> : vector<32x128xf32>
    %23 = tpu.matmul %20, %22, %cst_22 {dimension_numbers = #tpu.dot_dimension_numbers<[1], [0], [0], [1], [0, 0, 1, 1], [], []>} : vector<32x192xbf16>, vector<192x128xbf16>, vector<32x128xf32> -> vector<32x128xf32>
    %24 = arith.addf %16, %23 : vector<32x128xf32>
    %c0_23 = arith.constant 0 : index
    %c0_24 = arith.constant 0 : index
    %25 = vector.load %arg4[%c0_23, %c0_24] : memref<1x128xf32, #tpu.memory_space<vmem>>, vector<1x128xf32>
    %26 = vector.broadcast %25 : vector<1x128xf32> to vector<32x128xf32>
    %27 = arith.addf %24, %26 : vector<32x128xf32>
    %cst_25 = arith.constant 0.000000e+00 : f32
    %28 = vector.broadcast %cst_25 : f32 to vector<32x128xf32>
    %29 = arith.cmpf oge, %27, %28 : vector<32x128xf32>
    %cst_26 = arith.constant 2.000000e-01 : f32
    %30 = vector.broadcast %cst_26 : f32 to vector<32x128xf32>
    %31 = arith.mulf %30, %27 : vector<32x128xf32>
    %32 = arith.select %29, %27, %31 : vector<32x128xi1>, vector<32x128xf32>
    %33 = arith.truncf %32 : vector<32x128xf32> to vector<32x128xbf16>
    %c0_27 = arith.constant 0 : index
    %c0_28 = arith.constant 0 : index
    %c0_29 = arith.constant 0 : index
    %34 = vector.load %arg5[%c0_27, %c0_28, %c0_29] : memref<3x16x32xbf16, #tpu.memory_space<vmem>>, vector<1x16x32xbf16>
    %35 = vector.shape_cast %34 : vector<1x16x32xbf16> to vector<16x32xbf16>
    %cst_30 = arith.constant dense<0.000000e+00> : vector<16x128xf32>
    %36 = tpu.matmul %35, %33, %cst_30 {dimension_numbers = #tpu.dot_dimension_numbers<[1], [0], [0], [1], [0, 0, 1, 1], [], []>} : vector<16x32xbf16>, vector<32x128xbf16>, vector<16x128xf32> -> vector<16x128xf32>
    %37 = arith.truncf %36 : vector<16x128xf32> to vector<16x128xbf16>
    %c0_31 = arith.constant 0 : index
    %c0_32 = arith.constant 0 : index
    %c0_33 = arith.constant 0 : index
    %38 = vector.load %arg6[%c0_31, %c0_32, %c0_33] : memref<3x128x128xbf16, #tpu.memory_space<vmem>>, vector<1x128x128xbf16>
    %39 = vector.shape_cast %38 : vector<1x128x128xbf16> to vector<128x128xbf16>
    %cst_34 = arith.constant dense<0.000000e+00> : vector<16x128xf32>
    %40 = tpu.matmul %37, %39, %cst_34 {dimension_numbers = #tpu.dot_dimension_numbers<[1], [0], [0], [1], [0, 0, 1, 1], [], []>} : vector<16x128xbf16>, vector<128x128xbf16>, vector<16x128xf32> -> vector<16x128xf32>
    %c1_35 = arith.constant 1 : index
    %c0_36 = arith.constant 0 : index
    %c0_37 = arith.constant 0 : index
    %41 = vector.load %arg5[%c1_35, %c0_36, %c0_37] : memref<3x16x32xbf16, #tpu.memory_space<vmem>>, vector<1x16x32xbf16>
    %42 = vector.shape_cast %41 : vector<1x16x32xbf16> to vector<16x32xbf16>
    %cst_38 = arith.constant dense<0.000000e+00> : vector<16x128xf32>
    %43 = tpu.matmul %42, %33, %cst_38 {dimension_numbers = #tpu.dot_dimension_numbers<[1], [0], [0], [1], [0, 0, 1, 1], [], []>} : vector<16x32xbf16>, vector<32x128xbf16>, vector<16x128xf32> -> vector<16x128xf32>
    %44 = arith.truncf %43 : vector<16x128xf32> to vector<16x128xbf16>
    %c1_39 = arith.constant 1 : index
    %c0_40 = arith.constant 0 : index
    %c0_41 = arith.constant 0 : index
    %45 = vector.load %arg6[%c1_39, %c0_40, %c0_41] : memref<3x128x128xbf16, #tpu.memory_space<vmem>>, vector<1x128x128xbf16>
    %46 = vector.shape_cast %45 : vector<1x128x128xbf16> to vector<128x128xbf16>
    %cst_42 = arith.constant dense<0.000000e+00> : vector<16x128xf32>
    %47 = tpu.matmul %44, %46, %cst_42 {dimension_numbers = #tpu.dot_dimension_numbers<[1], [0], [0], [1], [0, 0, 1, 1], [], []>} : vector<16x128xbf16>, vector<128x128xbf16>, vector<16x128xf32> -> vector<16x128xf32>
    %48 = arith.addf %40, %47 : vector<16x128xf32>
    %c2_43 = arith.constant 2 : index
    %c0_44 = arith.constant 0 : index
    %c0_45 = arith.constant 0 : index
    %49 = vector.load %arg5[%c2_43, %c0_44, %c0_45] : memref<3x16x32xbf16, #tpu.memory_space<vmem>>, vector<1x16x32xbf16>
    %50 = vector.shape_cast %49 : vector<1x16x32xbf16> to vector<16x32xbf16>
    %cst_46 = arith.constant dense<0.000000e+00> : vector<16x128xf32>
    %51 = tpu.matmul %50, %33, %cst_46 {dimension_numbers = #tpu.dot_dimension_numbers<[1], [0], [0], [1], [0, 0, 1, 1], [], []>} : vector<16x32xbf16>, vector<32x128xbf16>, vector<16x128xf32> -> vector<16x128xf32>
    %52 = arith.truncf %51 : vector<16x128xf32> to vector<16x128xbf16>
    %c2_47 = arith.constant 2 : index
    %c0_48 = arith.constant 0 : index
    %c0_49 = arith.constant 0 : index
    %53 = vector.load %arg6[%c2_47, %c0_48, %c0_49] : memref<3x128x128xbf16, #tpu.memory_space<vmem>>, vector<1x128x128xbf16>
    %54 = vector.shape_cast %53 : vector<1x128x128xbf16> to vector<128x128xbf16>
    %cst_50 = arith.constant dense<0.000000e+00> : vector<16x128xf32>
    %55 = tpu.matmul %52, %54, %cst_50 {dimension_numbers = #tpu.dot_dimension_numbers<[1], [0], [0], [1], [0, 0, 1, 1], [], []>} : vector<16x128xbf16>, vector<128x128xbf16>, vector<16x128xf32> -> vector<16x128xf32>
    %56 = arith.addf %48, %55 : vector<16x128xf32>
    %c0_51 = arith.constant 0 : index
    %c0_52 = arith.constant 0 : index
    %57 = vector.load %arg7[%c0_51, %c0_52] : memref<1x128xf32, #tpu.memory_space<vmem>>, vector<1x128xf32>
    %58 = vector.broadcast %57 : vector<1x128xf32> to vector<16x128xf32>
    %59 = arith.addf %56, %58 : vector<16x128xf32>
    %cst_53 = arith.constant 0.000000e+00 : f32
    %60 = vector.broadcast %cst_53 : f32 to vector<16x128xf32>
    %61 = arith.cmpf oge, %59, %60 : vector<16x128xf32>
    %cst_54 = arith.constant 2.000000e-01 : f32
    %62 = vector.broadcast %cst_54 : f32 to vector<16x128xf32>
    %63 = arith.mulf %62, %59 : vector<16x128xf32>
    %64 = arith.select %61, %59, %63 : vector<16x128xi1>, vector<16x128xf32>
    %65 = arith.truncf %64 : vector<16x128xf32> to vector<16x128xbf16>
    %c0_55 = arith.constant 0 : index
    %c0_56 = arith.constant 0 : index
    %c0_57 = arith.constant 0 : index
    %66 = vector.load %arg8[%c0_55, %c0_56, %c0_57] : memref<3x8x16xbf16, #tpu.memory_space<vmem>>, vector<1x8x16xbf16>
    %67 = vector.shape_cast %66 : vector<1x8x16xbf16> to vector<8x16xbf16>
    %cst_58 = arith.constant dense<0.000000e+00> : vector<8x128xf32>
    %68 = tpu.matmul %67, %65, %cst_58 {dimension_numbers = #tpu.dot_dimension_numbers<[1], [0], [0], [1], [0, 0, 1, 1], [], []>} : vector<8x16xbf16>, vector<16x128xbf16>, vector<8x128xf32> -> vector<8x128xf32>
    %69 = arith.truncf %68 : vector<8x128xf32> to vector<8x128xbf16>
    %c0_59 = arith.constant 0 : index
    %c0_60 = arith.constant 0 : index
    %c0_61 = arith.constant 0 : index
    %70 = vector.load %arg9[%c0_59, %c0_60, %c0_61] : memref<3x128x128xbf16, #tpu.memory_space<vmem>>, vector<1x128x128xbf16>
    %71 = vector.shape_cast %70 : vector<1x128x128xbf16> to vector<128x128xbf16>
    %cst_62 = arith.constant dense<0.000000e+00> : vector<8x128xf32>
    %72 = tpu.matmul %69, %71, %cst_62 {dimension_numbers = #tpu.dot_dimension_numbers<[1], [0], [0], [1], [0, 0, 1, 1], [], []>} : vector<8x128xbf16>, vector<128x128xbf16>, vector<8x128xf32> -> vector<8x128xf32>
    %c1_63 = arith.constant 1 : index
    %c0_64 = arith.constant 0 : index
    %c0_65 = arith.constant 0 : index
    %73 = vector.load %arg8[%c1_63, %c0_64, %c0_65] : memref<3x8x16xbf16, #tpu.memory_space<vmem>>, vector<1x8x16xbf16>
    %74 = vector.shape_cast %73 : vector<1x8x16xbf16> to vector<8x16xbf16>
    %cst_66 = arith.constant dense<0.000000e+00> : vector<8x128xf32>
    %75 = tpu.matmul %74, %65, %cst_66 {dimension_numbers = #tpu.dot_dimension_numbers<[1], [0], [0], [1], [0, 0, 1, 1], [], []>} : vector<8x16xbf16>, vector<16x128xbf16>, vector<8x128xf32> -> vector<8x128xf32>
    %76 = arith.truncf %75 : vector<8x128xf32> to vector<8x128xbf16>
    %c1_67 = arith.constant 1 : index
    %c0_68 = arith.constant 0 : index
    %c0_69 = arith.constant 0 : index
    %77 = vector.load %arg9[%c1_67, %c0_68, %c0_69] : memref<3x128x128xbf16, #tpu.memory_space<vmem>>, vector<1x128x128xbf16>
    %78 = vector.shape_cast %77 : vector<1x128x128xbf16> to vector<128x128xbf16>
    %cst_70 = arith.constant dense<0.000000e+00> : vector<8x128xf32>
    %79 = tpu.matmul %76, %78, %cst_70 {dimension_numbers = #tpu.dot_dimension_numbers<[1], [0], [0], [1], [0, 0, 1, 1], [], []>} : vector<8x128xbf16>, vector<128x128xbf16>, vector<8x128xf32> -> vector<8x128xf32>
    %80 = arith.addf %72, %79 : vector<8x128xf32>
    %c2_71 = arith.constant 2 : index
    %c0_72 = arith.constant 0 : index
    %c0_73 = arith.constant 0 : index
    %81 = vector.load %arg8[%c2_71, %c0_72, %c0_73] : memref<3x8x16xbf16, #tpu.memory_space<vmem>>, vector<1x8x16xbf16>
    %82 = vector.shape_cast %81 : vector<1x8x16xbf16> to vector<8x16xbf16>
    %cst_74 = arith.constant dense<0.000000e+00> : vector<8x128xf32>
    %83 = tpu.matmul %82, %65, %cst_74 {dimension_numbers = #tpu.dot_dimension_numbers<[1], [0], [0], [1], [0, 0, 1, 1], [], []>} : vector<8x16xbf16>, vector<16x128xbf16>, vector<8x128xf32> -> vector<8x128xf32>
    %84 = arith.truncf %83 : vector<8x128xf32> to vector<8x128xbf16>
    %c2_75 = arith.constant 2 : index
    %c0_76 = arith.constant 0 : index
    %c0_77 = arith.constant 0 : index
    %85 = vector.load %arg9[%c2_75, %c0_76, %c0_77] : memref<3x128x128xbf16, #tpu.memory_space<vmem>>, vector<1x128x128xbf16>
    %86 = vector.shape_cast %85 : vector<1x128x128xbf16> to vector<128x128xbf16>
    %cst_78 = arith.constant dense<0.000000e+00> : vector<8x128xf32>
    %87 = tpu.matmul %84, %86, %cst_78 {dimension_numbers = #tpu.dot_dimension_numbers<[1], [0], [0], [1], [0, 0, 1, 1], [], []>} : vector<8x128xbf16>, vector<128x128xbf16>, vector<8x128xf32> -> vector<8x128xf32>
    %88 = arith.addf %80, %87 : vector<8x128xf32>
    %c0_79 = arith.constant 0 : index
    %c0_80 = arith.constant 0 : index
    %89 = vector.load %arg10[%c0_79, %c0_80] : memref<1x128xf32, #tpu.memory_space<vmem>>, vector<1x128xf32>
    %90 = vector.broadcast %89 : vector<1x128xf32> to vector<8x128xf32>
    %91 = arith.addf %88, %90 : vector<8x128xf32>
    %cst_81 = arith.constant 0.000000e+00 : f32
    %92 = vector.broadcast %cst_81 : f32 to vector<8x128xf32>
    %93 = arith.cmpf oge, %91, %92 : vector<8x128xf32>
    %cst_82 = arith.constant 2.000000e-01 : f32
    %94 = vector.broadcast %cst_82 : f32 to vector<8x128xf32>
    %95 = arith.mulf %94, %91 : vector<8x128xf32>
    %96 = arith.select %93, %91, %95 : vector<8x128xi1>, vector<8x128xf32>
    %97 = arith.truncf %96 : vector<8x128xf32> to vector<8x128xbf16>
    %c0_83 = arith.constant 0 : index
    %c0_84 = arith.constant 0 : index
    %c0_85 = arith.constant 0 : index
    %98 = vector.load %arg11[%c0_83, %c0_84, %c0_85] : memref<3x4x8xbf16, #tpu.memory_space<vmem>>, vector<1x4x8xbf16>
    %99 = vector.shape_cast %98 : vector<1x4x8xbf16> to vector<4x8xbf16>
    %cst_86 = arith.constant dense<0.000000e+00> : vector<4x128xf32>
    %100 = tpu.matmul %99, %97, %cst_86 {dimension_numbers = #tpu.dot_dimension_numbers<[1], [0], [0], [1], [0, 0, 1, 1], [], []>} : vector<4x8xbf16>, vector<8x128xbf16>, vector<4x128xf32> -> vector<4x128xf32>
    %101 = arith.truncf %100 : vector<4x128xf32> to vector<4x128xbf16>
    %c0_87 = arith.constant 0 : index
    %c0_88 = arith.constant 0 : index
    %c0_89 = arith.constant 0 : index
    %102 = vector.load %arg12[%c0_87, %c0_88, %c0_89] : memref<3x128x64xbf16, #tpu.memory_space<vmem>>, vector<1x128x64xbf16>
    %103 = vector.shape_cast %102 : vector<1x128x64xbf16> to vector<128x64xbf16>
    %cst_90 = arith.constant dense<0.000000e+00> : vector<4x64xf32>
    %104 = tpu.matmul %101, %103, %cst_90 {dimension_numbers = #tpu.dot_dimension_numbers<[1], [0], [0], [1], [0, 0, 1, 1], [], []>} : vector<4x128xbf16>, vector<128x64xbf16>, vector<4x64xf32> -> vector<4x64xf32>
    %c1_91 = arith.constant 1 : index
    %c0_92 = arith.constant 0 : index
    %c0_93 = arith.constant 0 : index
    %105 = vector.load %arg11[%c1_91, %c0_92, %c0_93] : memref<3x4x8xbf16, #tpu.memory_space<vmem>>, vector<1x4x8xbf16>
    %106 = vector.shape_cast %105 : vector<1x4x8xbf16> to vector<4x8xbf16>
    %cst_94 = arith.constant dense<0.000000e+00> : vector<4x128xf32>
    %107 = tpu.matmul %106, %97, %cst_94 {dimension_numbers = #tpu.dot_dimension_numbers<[1], [0], [0], [1], [0, 0, 1, 1], [], []>} : vector<4x8xbf16>, vector<8x128xbf16>, vector<4x128xf32> -> vector<4x128xf32>
    %108 = arith.truncf %107 : vector<4x128xf32> to vector<4x128xbf16>
    %c1_95 = arith.constant 1 : index
    %c0_96 = arith.constant 0 : index
    %c0_97 = arith.constant 0 : index
    %109 = vector.load %arg12[%c1_95, %c0_96, %c0_97] : memref<3x128x64xbf16, #tpu.memory_space<vmem>>, vector<1x128x64xbf16>
    %110 = vector.shape_cast %109 : vector<1x128x64xbf16> to vector<128x64xbf16>
    %cst_98 = arith.constant dense<0.000000e+00> : vector<4x64xf32>
    %111 = tpu.matmul %108, %110, %cst_98 {dimension_numbers = #tpu.dot_dimension_numbers<[1], [0], [0], [1], [0, 0, 1, 1], [], []>} : vector<4x128xbf16>, vector<128x64xbf16>, vector<4x64xf32> -> vector<4x64xf32>
    %112 = arith.addf %104, %111 : vector<4x64xf32>
    %c2_99 = arith.constant 2 : index
    %c0_100 = arith.constant 0 : index
    %c0_101 = arith.constant 0 : index
    %113 = vector.load %arg11[%c2_99, %c0_100, %c0_101] : memref<3x4x8xbf16, #tpu.memory_space<vmem>>, vector<1x4x8xbf16>
    %114 = vector.shape_cast %113 : vector<1x4x8xbf16> to vector<4x8xbf16>
    %cst_102 = arith.constant dense<0.000000e+00> : vector<4x128xf32>
    %115 = tpu.matmul %114, %97, %cst_102 {dimension_numbers = #tpu.dot_dimension_numbers<[1], [0], [0], [1], [0, 0, 1, 1], [], []>} : vector<4x8xbf16>, vector<8x128xbf16>, vector<4x128xf32> -> vector<4x128xf32>
    %116 = arith.truncf %115 : vector<4x128xf32> to vector<4x128xbf16>
    %c2_103 = arith.constant 2 : index
    %c0_104 = arith.constant 0 : index
    %c0_105 = arith.constant 0 : index
    %117 = vector.load %arg12[%c2_103, %c0_104, %c0_105] : memref<3x128x64xbf16, #tpu.memory_space<vmem>>, vector<1x128x64xbf16>
    %118 = vector.shape_cast %117 : vector<1x128x64xbf16> to vector<128x64xbf16>
    %cst_106 = arith.constant dense<0.000000e+00> : vector<4x64xf32>
    %119 = tpu.matmul %116, %118, %cst_106 {dimension_numbers = #tpu.dot_dimension_numbers<[1], [0], [0], [1], [0, 0, 1, 1], [], []>} : vector<4x128xbf16>, vector<128x64xbf16>, vector<4x64xf32> -> vector<4x64xf32>
    %120 = arith.addf %112, %119 : vector<4x64xf32>
    %c0_107 = arith.constant 0 : index
    %c0_108 = arith.constant 0 : index
    %121 = vector.load %arg13[%c0_107, %c0_108] : memref<1x64xf32, #tpu.memory_space<vmem>>, vector<1x64xf32>
    %122 = vector.broadcast %121 : vector<1x64xf32> to vector<4x64xf32>
    %123 = arith.addf %120, %122 : vector<4x64xf32>
    %124 = arith.negf %123 : vector<4x64xf32>
    %125 = math.exp %124 : vector<4x64xf32>
    %cst_109 = arith.constant 1.000000e+00 : f32
    %126 = vector.broadcast %cst_109 : f32 to vector<4x64xf32>
    %127 = arith.addf %126, %125 : vector<4x64xf32>
    %128 = arith.divf %126, %127 : vector<4x64xf32>
    %c0_110 = arith.constant 0 : index
    %c0_111 = arith.constant 0 : index
    %c0_112 = arith.constant 0 : index
    %129 = vector.load %arg14[%c0_110, %c0_111, %c0_112] : memref<1x4x64xf32, #tpu.memory_space<vmem>>, vector<1x4x64xf32>
    %130 = vector.shape_cast %129 : vector<1x4x64xf32> to vector<4x64xf32>
    %131 = vector.shape_cast %128 : vector<4x64xf32> to vector<1x4x64xf32>
    tpu.vector_store %arg14[%c0_110, %c0_111, %c0_112], %131 {strides = array<i32>} : memref<1x4x64xf32, #tpu.memory_space<vmem>>, vector<1x4x64xf32>,
    return
  }
  func.func @transform_0(%arg0: i32) -> (i32, i32, i32) {
    %c0_i32 = arith.constant 0 : i32
    %c0_i32_0 = arith.constant 0 : i32
    %c0_i32_1 = arith.constant 0 : i32
    return %arg0, %c0_i32, %c0_i32_0 : i32, i32, i32
  }
  func.func @transform_1(%arg0: i32) -> (i32, i32, i32) {
    %c0_i32 = arith.constant 0 : i32
    %c0_i32_0 = arith.constant 0 : i32
    %c0_i32_1 = arith.constant 0 : i32
    %c0_i32_2 = arith.constant 0 : i32
    return %c0_i32, %c0_i32_0, %c0_i32_1 : i32, i32, i32
  }
  func.func @transform_2(%arg0: i32) -> (i32, i32, i32) {
    %c0_i32 = arith.constant 0 : i32
    %c0_i32_0 = arith.constant 0 : i32
    %c0_i32_1 = arith.constant 0 : i32
    %c0_i32_2 = arith.constant 0 : i32
    return %c0_i32, %c0_i32_0, %c0_i32_1 : i32, i32, i32
  }
  func.func @transform_3(%arg0: i32) -> (i32, i32) {
    %c0_i32 = arith.constant 0 : i32
    %c0_i32_0 = arith.constant 0 : i32
    %c0_i32_1 = arith.constant 0 : i32
    return %c0_i32, %c0_i32_0 : i32, i32
  }
  func.func @transform_4(%arg0: i32) -> (i32, i32, i32) {
    %c0_i32 = arith.constant 0 : i32
    %c0_i32_0 = arith.constant 0 : i32
    %c0_i32_1 = arith.constant 0 : i32
    %c0_i32_2 = arith.constant 0 : i32
    return %c0_i32, %c0_i32_0, %c0_i32_1 : i32, i32, i32
  }
  func.func @transform_5(%arg0: i32) -> (i32, i32, i32) {
    %c0_i32 = arith.constant 0 : i32
    %c0_i32_0 = arith.constant 0 : i32
    %c0_i32_1 = arith.constant 0 : i32
    %c0_i32_2 = arith.constant 0 : i32
    return %c0_i32, %c0_i32_0, %c0_i32_1 : i32, i32, i32
  }
  func.func @transform_6(%arg0: i32) -> (i32, i32) {
    %c0_i32 = arith.constant 0 : i32
    %c0_i32_0 = arith.constant 0 : i32
    %c0_i32_1 = arith.constant 0 : i32
    return %c0_i32, %c0_i32_0 : i32, i32
  }
  func.func @transform_7(%arg0: i32) -> (i32, i32, i32) {
    %c0_i32 = arith.constant 0 : i32
    %c0_i32_0 = arith.constant 0 : i32
    %c0_i32_1 = arith.constant 0 : i32
    %c0_i32_2 = arith.constant 0 : i32
    return %c0_i32, %c0_i32_0, %c0_i32_1 : i32, i32, i32
  }
  func.func @transform_8(%arg0: i32) -> (i32, i32, i32) {
    %c0_i32 = arith.constant 0 : i32
    %c0_i32_0 = arith.constant 0 : i32
    %c0_i32_1 = arith.constant 0 : i32
    %c0_i32_2 = arith.constant 0 : i32
    return %c0_i32, %c0_i32_0, %c0_i32_1 : i32, i32, i32
  }
  func.func @transform_9(%arg0: i32) -> (i32, i32) {
    %c0_i32 = arith.constant 0 : i32
    %c0_i32_0 = arith.constant 0 : i32
    %c0_i32_1 = arith.constant 0 : i32
    return %c0_i32, %c0_i32_0 : i32, i32
  }
  func.func @transform_10(%arg0: i32) -> (i32, i32, i32) {
    %c0_i32 = arith.constant 0 : i32
    %c0_i32_0 = arith.constant 0 : i32
    %c0_i32_1 = arith.constant 0 : i32
    %c0_i32_2 = arith.constant 0 : i32
    return %c0_i32, %c0_i32_0, %c0_i32_1 : i32, i32, i32
  }
  func.func @transform_11(%arg0: i32) -> (i32, i32, i32) {
    %c0_i32 = arith.constant 0 : i32
    %c0_i32_0 = arith.constant 0 : i32
    %c0_i32_1 = arith.constant 0 : i32
    %c0_i32_2 = arith.constant 0 : i32
    return %c0_i32, %c0_i32_0, %c0_i32_1 : i32, i32, i32
  }
  func.func @transform_12(%arg0: i32) -> (i32, i32) {
    %c0_i32 = arith.constant 0 : i32
    %c0_i32_0 = arith.constant 0 : i32
    %c0_i32_1 = arith.constant 0 : i32
    return %c0_i32, %c0_i32_0 : i32, i32
  }
  func.func @transform_13(%arg0: i32) -> (i32, i32, i32) {
    %c0_i32 = arith.constant 0 : i32
    %c0_i32_0 = arith.constant 0 : i32
    %c0_i32_1 = arith.constant 0 : i32
    return %arg0, %c0_i32, %c0_i32_0 : i32, i32, i32
  }
}

</mosaic_0001>

<llo_original>
// kernel: discriminator_forward.1
$region0: #{discriminator_forward.1}
  #allocation0 [shape = 'u32[]', space=smem, size = 0x4, offset = 0x4, fixed_abs, tag = 'smem constant byte address 0x4 - core index']
  #allocation1 [shape = 'u32[72,128]{1,0:T(1,128)}', space=vmem, size = 0x9000, scoped, tag = 'internal scratch']
  %s0 = inlined_call_operand.vmem [shape: bf16[2,64,192], index: 0, kind: input, shape index: {}]
  %s1 = inlined_call_operand.vmem [shape: bf16[3,32,64], index: 1, kind: input, shape index: {}]
  %s2 = inlined_call_operand.vmem [shape: bf16[3,192,128], index: 2, kind: input, shape index: {}]
  %s3 = inlined_call_operand.vmem [shape: f32[1,128], index: 3, kind: input, shape index: {}]
  %s4 = inlined_call_operand.vmem [shape: bf16[3,16,32], index: 4, kind: input, shape index: {}]
  %s5 = inlined_call_operand.vmem [shape: bf16[3,128,128], index: 5, kind: input, shape index: {}]
  %s6 = inlined_call_operand.vmem [shape: f32[1,128], index: 6, kind: input, shape index: {}]
  %s7 = inlined_call_operand.vmem [shape: bf16[3,8,16], index: 7, kind: input, shape index: {}]
  %s8 = inlined_call_operand.vmem [shape: bf16[3,128,128], index: 8, kind: input, shape index: {}]
  %s9 = inlined_call_operand.vmem [shape: f32[1,128], index: 9, kind: input, shape index: {}]
  %s10 = inlined_call_operand.vmem [shape: bf16[3,4,8], index: 10, kind: input, shape index: {}]
  %s11 = inlined_call_operand.vmem [shape: bf16[3,128,64], index: 11, kind: input, shape index: {}]
  %s12 = inlined_call_operand.vmem [shape: f32[1,64], index: 12, kind: input, shape index: {}]
  %s13 = inlined_call_operand.vmem [shape: f32[2,4,64], index: 13, kind: output, shape index: {}]
  %s14 = sld [smem:[#allocation0]]
  $region85: #{discriminator_forward.1} parent=0
    _
  %s16 = ssub.s32 1, %s14
  %s17 = scalar_select 0, %s16, %s14
  loop: start=0, step=1, limit=4
  $region2: #{discriminator_forward.1} parent=0 // loop_pre_header
    _
  $region3: #{discriminator_forward.1} parent=0 // loop_header
    %s19 = sphi 0, %s23
    %p20 = scmp.ge.s32.totalorder %s19, 4
    %s29 = sphi 0, %s31
    %s32 = sphi 0, %s29
    %s33 = sphi 0, %s32
    %s49 = sphi 0, %s33
    %s53 = sphi 0, %s53
    %s55 = sphi 0, %s53
    %s56 = sphi 0, %s55
    %s70 = sphi 0, %s56
    %s74 = sphi 0, %s74
    %s76 = sphi 0, %s74
    %s77 = sphi 0, %s76
    %s91 = sphi 0, %s77
    %s95 = sphi 0, %s95
    %s97 = sphi 0, %s95
    %s98 = sphi 0, %s97
    %s112 = sphi 0, %s98
    %s116 = sphi 0, %s116
    %s118 = sphi 0, %s116
    %s119 = sphi 0, %s118
    %s133 = sphi 0, %s119
    %s137 = sphi 0, %s137
    %s139 = sphi 0, %s137
    %s140 = sphi 0, %s139
    %s154 = sphi 0, %s140
    %s158 = sphi 0, %s158
    %s160 = sphi 0, %s158
    %s161 = sphi 0, %s160
    %s175 = sphi 0, %s161
    %s179 = sphi 0, %s179
    %s181 = sphi 0, %s179
    %s182 = sphi 0, %s181
    %s196 = sphi 0, %s182
    %s200 = sphi 0, %s200
    %s202 = sphi 0, %s200
    %s203 = sphi 0, %s202
    %s217 = sphi 0, %s203
    %s221 = sphi 0, %s221
    %s223 = sphi 0, %s221
    %s224 = sphi 0, %s223
    %s238 = sphi 0, %s224
    %s242 = sphi 0, %s242
    %s244 = sphi 0, %s242
    %s245 = sphi 0, %s244
    %s259 = sphi 0, %s245
    %s263 = sphi 0, %s263
    %s265 = sphi 0, %s263
    %s266 = sphi 0, %s265
    %s280 = sphi 0, %s266
    %s284 = sphi 0, %s284
    %s286 = sphi 0, %s284
    %s287 = sphi 0, %s286
    %s301 = sphi 0, %s287
    %s307 = sphi 0, %s309
    %s310 = sphi 0, %s307
    %s311 = sphi 0, %s310
    %s327 = sphi 0, %s311
  $region4: #{discriminator_forward.1} parent=0 // loop_header_branch
    %22 = sbr.rel (%p20) target = $region8
  $region5: #{discriminator_forward.1} parent=0 // loop_body
    %s24 = ssub.s32 %s19, 1
    %s25 = ssub.s32 %s19, 2
    %s26 = sadd.s32 %s19, 1
    %s27 = ssub.s32 %s19, %s26
    %p28 = scmp.eq.s32.totalorder %s27, 0
    %s30 = sadd.s32 %s29, 1
    %s31 = scalar_select %p28, %s29, %s30
    %p34 = pneg %p28
    %p35 = scmp.eq.s32.totalorder %s19, 1
    %p36 = por %p34, %p35
    %p37 = scmp.ne.s32.totalorder %s29, %s32
    %p38 = scmp.eq.s32.totalorder %s19, 0
    %p39 = por %p37, %p38
    %p40 = scmp.ne.s32.totalorder %s29, %s32
    %p41 = scmp.eq.s32.totalorder %s24, 1
    %p42 = por %p40, %p41
    %p43 = scmp.ne.s32.totalorder %s32, %s33
    %p44 = scmp.eq.s32.totalorder %s24, 0
    %p45 = por %p43, %p44
    %p46 = scmp.ne.s32.totalorder %s32, %s33
    %p47 = scmp.eq.s32.totalorder %s25, 1
    %p48 = por %p46, %p47
    %p50 = scmp.ne.s32.totalorder %s33, %s49
    %p51 = scmp.eq.s32.totalorder %s25, 0
    %p52 = por %p50, %p51
    %s54 = sadd.s32 %s53, 1
    %p57 = scmp.eq.s32.totalorder %s19, 1
    %p58 = scmp.ne.s32.totalorder %s53, %s55
    %p59 = scmp.eq.s32.totalorder %s19, 0
    %p60 = por %p58, %p59
    %p61 = scmp.ne.s32.totalorder %s53, %s55
    %p62 = scmp.eq.s32.totalorder %s24, 1
    %p63 = por %p61, %p62
    %p64 = scmp.ne.s32.totalorder %s55, %s56
    %p65 = scmp.eq.s32.totalorder %s24, 0
    %p66 = por %p64, %p65
    %p67 = scmp.ne.s32.totalorder %s55, %s56
    %p68 = scmp.eq.s32.totalorder %s25, 1
    %p69 = por %p67, %p68
    %p71 = scmp.ne.s32.totalorder %s56, %s70
    %p72 = scmp.eq.s32.totalorder %s25, 0
    %p73 = por %p71, %p72
    %s75 = sadd.s32 %s74, 1
    %p78 = scmp.eq.s32.totalorder %s19, 1
    %p79 = scmp.ne.s32.totalorder %s74, %s76
    %p80 = scmp.eq.s32.totalorder %s19, 0
    %p81 = por %p79, %p80
    %p82 = scmp.ne.s32.totalorder %s74, %s76
    %p83 = scmp.eq.s32.totalorder %s24, 1
    %p84 = por %p82, %p83
    %p85 = scmp.ne.s32.totalorder %s76, %s77
    %p86 = scmp.eq.s32.totalorder %s24, 0
    %p87 = por %p85, %p86
    %p88 = scmp.ne.s32.totalorder %s76, %s77
    %p89 = scmp.eq.s32.totalorder %s25, 1
    %p90 = por %p88, %p89
    %p92 = scmp.ne.s32.totalorder %s77, %s91
    %p93 = scmp.eq.s32.totalorder %s25, 0
    %p94 = por %p92, %p93
    %s96 = sadd.s32 %s95, 1
    %p99 = scmp.eq.s32.totalorder %s19, 1
    %p100 = scmp.ne.s32.totalorder %s95, %s97
    %p101 = scmp.eq.s32.totalorder %s19, 0
    %p102 = por %p100, %p101
    %p103 = scmp.ne.s32.totalorder %s95, %s97
    %p104 = scmp.eq.s32.totalorder %s24, 1
    %p105 = por %p103, %p104
    %p106 = scmp.ne.s32.totalorder %s97, %s98
    %p107 = scmp.eq.s32.totalorder %s24, 0
    %p108 = por %p106, %p107
    %p109 = scmp.ne.s32.totalorder %s97, %s98
    %p110 = scmp.eq.s32.totalorder %s25, 1
    %p111 = por %p109, %p110
    %p113 = scmp.ne.s32.totalorder %s98, %s112
    %p114 = scmp.eq.s32.totalorder %s25, 0
    %p115 = por %p113, %p114
    %s117 = sadd.s32 %s116, 1
    %p120 = scmp.eq.s32.totalorder %s19, 1
    %p121 = scmp.ne.s32.totalorder %s116, %s118
    %p122 = scmp.eq.s32.totalorder %s19, 0
    %p123 = por %p121, %p122
    %p124 = scmp.ne.s32.totalorder %s116, %s118
    %p125 = scmp.eq.s32.totalorder %s24, 1
    %p126 = por %p124, %p125
    %p127 = scmp.ne.s32.totalorder %s118, %s119
    %p128 = scmp.eq.s32.totalorder %s24, 0
    %p129 = por %p127, %p128
    %p130 = scmp.ne.s32.totalorder %s118, %s119
    %p131 = scmp.eq.s32.totalorder %s25, 1
    %p132 = por %p130, %p131
    %p134 = scmp.ne.s32.totalorder %s119, %s133
    %p135 = scmp.eq.s32.totalorder %s25, 0
    %p136 = por %p134, %p135
    %s138 = sadd.s32 %s137, 1
    %p141 = scmp.eq.s32.totalorder %s19, 1
    %p142 = scmp.ne.s32.totalorder %s137, %s139
    %p143 = scmp.eq.s32.totalorder %s19, 0
    %p144 = por %p142, %p143
    %p145 = scmp.ne.s32.totalorder %s137, %s139
    %p146 = scmp.eq.s32.totalorder %s24, 1
    %p147 = por %p145, %p146
    %p148 = scmp.ne.s32.totalorder %s139, %s140
    %p149 = scmp.eq.s32.totalorder %s24, 0
    %p150 = por %p148, %p149
    %p151 = scmp.ne.s32.totalorder %s139, %s140
    %p152 = scmp.eq.s32.totalorder %s25, 1
    %p153 = por %p151, %p152
    %p155 = scmp.ne.s32.totalorder %s140, %s154
    %p156 = scmp.eq.s32.totalorder %s25, 0
    %p157 = por %p155, %p156
    %s159 = sadd.s32 %s158, 1
    %p162 = scmp.eq.s32.totalorder %s19, 1
    %p163 = scmp.ne.s32.totalorder %s158, %s160
    %p164 = scmp.eq.s32.totalorder %s19, 0
    %p165 = por %p163, %p164
    %p166 = scmp.ne.s32.totalorder %s158, %s160
    %p167 = scmp.eq.s32.totalorder %s24, 1
    %p168 = por %p166, %p167
    %p169 = scmp.ne.s32.totalorder %s160, %s161
    %p170 = scmp.eq.s32.totalorder %s24, 0
    %p171 = por %p169, %p170
    %p172 = scmp.ne.s32.totalorder %s160, %s161
    %p173 = scmp.eq.s32.totalorder %s25, 1
    %p174 = por %p172, %p173
    %p176 = scmp.ne.s32.totalorder %s161, %s175
    %p177 = scmp.eq.s32.totalorder %s25, 0
    %p178 = por %p176, %p177
    %s180 = sadd.s32 %s179, 1
    %p183 = scmp.eq.s32.totalorder %s19, 1
    %p184 = scmp.ne.s32.totalorder %s179, %s181
    %p185 = scmp.eq.s32.totalorder %s19, 0
    %p186 = por %p184, %p185
    %p187 = scmp.ne.s32.totalorder %s179, %s181
    %p188 = scmp.eq.s32.totalorder %s24, 1
    %p189 = por %p187, %p188
    %p190 = scmp.ne.s32.totalorder %s181, %s182
    %p191 = scmp.eq.s32.totalorder %s24, 0
    %p192 = por %p190, %p191
    %p193 = scmp.ne.s32.totalorder %s181, %s182
    %p194 = scmp.eq.s32.totalorder %s25, 1
    %p195 = por %p193, %p194
    %p197 = scmp.ne.s32.totalorder %s182, %s196
    %p198 = scmp.eq.s32.totalorder %s25, 0
    %p199 = por %p197, %p198
    %s201 = sadd.s32 %s200, 1
    %p204 = scmp.eq.s32.totalorder %s19, 1
    %p205 = scmp.ne.s32.totalorder %s200, %s202
    %p206 = scmp.eq.s32.totalorder %s19, 0
    %p207 = por %p205, %p206
    %p208 = scmp.ne.s32.totalorder %s200, %s202
    %p209 = scmp.eq.s32.totalorder %s24, 1
    %p210 = por %p208, %p209
    %p211 = scmp.ne.s32.totalorder %s202, %s203
    %p212 = scmp.eq.s32.totalorder %s24, 0
    %p213 = por %p211, %p212
    %p214 = scmp.ne.s32.totalorder %s202, %s203
    %p215 = scmp.eq.s32.totalorder %s25, 1
    %p216 = por %p214, %p215
    %p218 = scmp.ne.s32.totalorder %s203, %s217
    %p219 = scmp.eq.s32.totalorder %s25, 0
    %p220 = por %p218, %p219
    %s222 = sadd.s32 %s221, 1
    %p225 = scmp.eq.s32.totalorder %s19, 1
    %p226 = scmp.ne.s32.totalorder %s221, %s223
    %p227 = scmp.eq.s32.totalorder %s19, 0
    %p228 = por %p226, %p227
    %p229 = scmp.ne.s32.totalorder %s221, %s223
    %p230 = scmp.eq.s32.totalorder %s24, 1
    %p231 = por %p229, %p230
    %p232 = scmp.ne.s32.totalorder %s223, %s224
    %p233 = scmp.eq.s32.totalorder %s24, 0
    %p234 = por %p232, %p233
    %p235 = scmp.ne.s32.totalorder %s223, %s224
    %p236 = scmp.eq.s32.totalorder %s25, 1
    %p237 = por %p235, %p236
    %p239 = scmp.ne.s32.totalorder %s224, %s238
    %p240 = scmp.eq.s32.totalorder %s25, 0
    %p241 = por %p239, %p240
    %s243 = sadd.s32 %s242, 1
    %p246 = scmp.eq.s32.totalorder %s19, 1
    %p247 = scmp.ne.s32.totalorder %s242, %s244
    %p248 = scmp.eq.s32.totalorder %s19, 0
    %p249 = por %p247, %p248
    %p250 = scmp.ne.s32.totalorder %s242, %s244
    %p251 = scmp.eq.s32.totalorder %s24, 1
    %p252 = por %p250, %p251
    %p253 = scmp.ne.s32.totalorder %s244, %s245
    %p254 = scmp.eq.s32.totalorder %s24, 0
    %p255 = por %p253, %p254
    %p256 = scmp.ne.s32.totalorder %s244, %s245
    %p257 = scmp.eq.s32.totalorder %s25, 1
    %p258 = por %p256, %p257
    %p260 = scmp.ne.s32.totalorder %s245, %s259
    %p261 = scmp.eq.s32.totalorder %s25, 0
    %p262 = por %p260, %p261
    %s264 = sadd.s32 %s263, 1
    %p267 = scmp.eq.s32.totalorder %s19, 1
    %p268 = scmp.ne.s32.totalorder %s263, %s265
    %p269 = scmp.eq.s32.totalorder %s19, 0
    %p270 = por %p268, %p269
    %p271 = scmp.ne.s32.totalorder %s263, %s265
    %p272 = scmp.eq.s32.totalorder %s24, 1
    %p273 = por %p271, %p272
    %p274 = scmp.ne.s32.totalorder %s265, %s266
    %p275 = scmp.eq.s32.totalorder %s24, 0
    %p276 = por %p274, %p275
    %p277 = scmp.ne.s32.totalorder %s265, %s266
    %p278 = scmp.eq.s32.totalorder %s25, 1
    %p279 = por %p277, %p278
    %p281 = scmp.ne.s32.totalorder %s266, %s280
    %p282 = scmp.eq.s32.totalorder %s25, 0
    %p283 = por %p281, %p282
    %s285 = sadd.s32 %s284, 1
    %p288 = scmp.eq.s32.totalorder %s19, 1
    %p289 = scmp.ne.s32.totalorder %s284, %s286
    %p290 = scmp.eq.s32.totalorder %s19, 0
    %p291 = por %p289, %p290
    %p292 = scmp.ne.s32.totalorder %s284, %s286
    %p293 = scmp.eq.s32.totalorder %s24, 1
    %p294 = por %p292, %p293
    %p295 = scmp.ne.s32.totalorder %s286, %s287
    %p296 = scmp.eq.s32.totalorder %s24, 0
    %p297 = por %p295, %p296
    %p298 = scmp.ne.s32.totalorder %s286, %s287
    %p299 = scmp.eq.s32.totalorder %s25, 1
    %p300 = por %p298, %p299
    %p302 = scmp.ne.s32.totalorder %s287, %s301
    %p303 = scmp.eq.s32.totalorder %s25, 0
    %p304 = por %p302, %p303
    %s305 = ssub.s32 %s19, %s26
    %p306 = scmp.eq.s32.totalorder %s305, 0
    %s308 = sadd.s32 %s307, 1
    %s309 = scalar_select %p306, %s307, %s308
    %p312 = pneg %p306
    %p313 = scmp.eq.s32.totalorder %s19, 1
    %p314 = por %p312, %p313
    %p315 = scmp.ne.s32.totalorder %s307, %s310
    %p316 = scmp.eq.s32.totalorder %s19, 0
    %p317 = por %p315, %p316
    %p318 = scmp.ne.s32.totalorder %s307, %s310
    %p319 = scmp.eq.s32.totalorder %s24, 1
    %p320 = por %p318, %p319
    %p321 = scmp.ne.s32.totalorder %s310, %s311
    %p322 = scmp.eq.s32.totalorder %s24, 0
    %p323 = por %p321, %p322
    %p324 = scmp.ne.s32.totalorder %s310, %s311
    %p325 = scmp.eq.s32.totalorder %s25, 1
    %p326 = por %p324, %p325
    %p328 = scmp.ne.s32.totalorder %s311, %s327
    %p329 = scmp.eq.s32.totalorder %s25, 0
    %p330 = por %p328, %p329
    %p331 = scmp.le.s32.totalorder 1, %s19
    %p332 = scmp.lt.s32.totalorder %s19, 3
    %p333 = pnand %p331, %p332
    %p334 = pneg %p333
    // Predicated region
    $region9: #{discriminator_forward.1} parent=5 // pred_check
      _
    $region10: #{discriminator_forward.1} parent=5 // pred_check_branch
      %336 = sbr.rel (%p333) target = $region12
    $region11: #{discriminator_forward.1} parent=5 // pred_region
      %s337 = ssub.s32 %s19, 1
      // Predicated region
      $region13: #{discriminator_forward.1} parent=11 // pred_check
        %p338 = pneg %p66
      $region14: #{discriminator_forward.1} parent=11 // pred_check_branch
        %340 = sbr.rel (%p338) target = $region16
      $region15: #{discriminator_forward.1} parent=11 // pred_region
        _
      $region16: #{discriminator_forward.1} parent=11 // pred_fallthru
        _
      // Predicated region
      $region17: #{discriminator_forward.1} parent=11 // pred_check
        %p341 = pneg %p87
      $region18: #{discriminator_forward.1} parent=11 // pred_check_branch
        %343 = sbr.rel (%p341) target = $region20
      $region19: #{discriminator_forward.1} parent=11 // pred_region
        _
      $region20: #{discriminator_forward.1} parent=11 // pred_fallthru
        _
      // Predicated region
      $region21: #{discriminator_forward.1} parent=11 // pred_check
        %p344 = pneg %p108
      $region22: #{discriminator_forward.1} parent=11 // pred_check_branch
        %346 = sbr.rel (%p344) target = $region24
      $region23: #{discriminator_forward.1} parent=11 // pred_region
        _
      $region24: #{discriminator_forward.1} parent=11 // pred_fallthru
        _
      // Predicated region
      $region25: #{discriminator_forward.1} parent=11 // pred_check
        %p347 = pneg %p129
      $region26: #{discriminator_forward.1} parent=11 // pred_check_branch
        %349 = sbr.rel (%p347) target = $region28
      $region27: #{discriminator_forward.1} parent=11 // pred_region
        _
      $region28: #{discriminator_forward.1} parent=11 // pred_fallthru
        _
      // Predicated region
      $region29: #{discriminator_forward.1} parent=11 // pred_check
        %p350 = pneg %p150
      $region30: #{discriminator_forward.1} parent=11 // pred_check_branch
        %352 = sbr.rel (%p350) target = $region32
      $region31: #{discriminator_forward.1} parent=11 // pred_region
        _
      $region32: #{discriminator_forward.1} parent=11 // pred_fallthru
        _
      // Predicated region
      $region33: #{discriminator_forward.1} parent=11 // pred_check
        %p353 = pneg %p171
      $region34: #{discriminator_forward.1} parent=11 // pred_check_branch
        %355 = sbr.rel (%p353) target = $region36
      $region35: #{discriminator_forward.1} parent=11 // pred_region
        _
      $region36: #{discriminator_forward.1} parent=11 // pred_fallthru
        _
      // Predicated region
      $region37: #{discriminator_forward.1} parent=11 // pred_check
        %p356 = pneg %p192
      $region38: #{discriminator_forward.1} parent=11 // pred_check_branch
        %358 = sbr.rel (%p356) target = $region40
      $region39: #{discriminator_forward.1} parent=11 // pred_region
        _
      $region40: #{discriminator_forward.1} parent=11 // pred_fallthru
        _
      // Predicated region
      $region41: #{discriminator_forward.1} parent=11 // pred_check
        %p359 = pneg %p213
      $region42: #{discriminator_forward.1} parent=11 // pred_check_branch
        %361 = sbr.rel (%p359) target = $region44
      $region43: #{discriminator_forward.1} parent=11 // pred_region
        _
      $region44: #{discriminator_forward.1} parent=11 // pred_fallthru
        _
      // Predicated region
      $region45: #{discriminator_forward.1} parent=11 // pred_check
        %p362 = pneg %p234
      $region46: #{discriminator_forward.1} parent=11 // pred_check_branch
        %364 = sbr.rel (%p362) target = $region48
      $region47: #{discriminator_forward.1} parent=11 // pred_region
        _
      $region48: #{discriminator_forward.1} parent=11 // pred_fallthru
        _
      // Predicated region
      $region49: #{discriminator_forward.1} parent=11 // pred_check
        %p365 = pneg %p255
      $region50: #{discriminator_forward.1} parent=11 // pred_check_branch
        %367 = sbr.rel (%p365) target = $region52
      $region51: #{discriminator_forward.1} parent=11 // pred_region
        _
      $region52: #{discriminator_forward.1} parent=11 // pred_fallthru
        _
      // Predicated region
      $region53: #{discriminator_forward.1} parent=11 // pred_check
        %p368 = pneg %p276
      $region54: #{discriminator_forward.1} parent=11 // pred_check_branch
        %370 = sbr.rel (%p368) target = $region56
      $region55: #{discriminator_forward.1} parent=11 // pred_region
        _
      $region56: #{discriminator_forward.1} parent=11 // pred_fallthru
        _
      // Predicated region
      $region57: #{discriminator_forward.1} parent=11 // pred_check
        %p371 = pneg %p297
      $region58: #{discriminator_forward.1} parent=11 // pred_check_branch
        %373 = sbr.rel (%p371) target = $region60
      $region59: #{discriminator_forward.1} parent=11 // pred_region
        _
      $region60: #{discriminator_forward.1} parent=11 // pred_fallthru
        _
    $region12: #{discriminator_forward.1} parent=5 // pred_fallthru
      _
    %p374 = scmp.lt.s32.totalorder %s19, 2
    // Predicated region
    $region61: #{discriminator_forward.1} parent=5 // pred_check
      %p375 = pneg %p374
    $region62: #{discriminator_forward.1} parent=5 // pred_check_branch
      %377 = sbr.rel (%p375) target = $region64
    $region63: #{discriminator_forward.1} parent=5 // pred_region
      // Predicated region
      $region65: #{discriminator_forward.1} parent=63 // pred_check
        %p378 = pneg %p39
      $region66: #{discriminator_forward.1} parent=63 // pred_check_branch
        %380 = sbr.rel (%p378) target = $region68
      $region67: #{discriminator_forward.1} parent=63 // pred_region
        %p381 = scmp.lt.s32.totalorder %s19, 1
        %s382 = scalar_select %p381, %s19, 1
        %s383 = smul.addr %s382, 16
        %s384 = smul.addr %s383, 4
        %s385 = scalar_lea.vmem %s0, %s384
      $region68: #{discriminator_forward.1} parent=63 // pred_fallthru
        _
    $region64: #{discriminator_forward.1} parent=5 // pred_fallthru
      _
    %p386 = scmp.le.s32.totalorder 1, %s19
    %p387 = scmp.lt.s32.totalorder %s19, 3
    %p388 = pnand %p386, %p387
    %p389 = pneg %p388
    // Predicated region
    $region69: #{discriminator_forward.1} parent=5 // pred_check
      _
    $region70: #{discriminator_forward.1} parent=5 // pred_check_branch
      %391 = sbr.rel (%p388) target = $region72
    $region71: #{discriminator_forward.1} parent=5 // pred_region
      %s392 = ssub.s32 %s19, 1
      %p393 = scmp.lt.s32.totalorder %s24, 1
      %s394 = scalar_select %p393, %s24, 1
      %s395 = smul.addr %s394, 16
      %s396 = smul.addr %s395, 4
      %s397 = scalar_lea.vmem %s0, %s396
      %p398 = pneg %p45
      %p399 = pneg %p42
      %p400 = pneg %p66
      %p401 = pneg %p63
      %p402 = pneg %p87
      %p403 = pneg %p84
      %p404 = pneg %p108
      %p405 = pneg %p105
      %p406 = pneg %p129
      %p407 = pneg %p126
      %p408 = pneg %p150
      %p409 = pneg %p147
      %p410 = pneg %p171
      %p411 = pneg %p168
      %p412 = pneg %p192
      %p413 = pneg %p189
      %p414 = pneg %p213
      %p415 = pneg %p210
      %p416 = pneg %p234
      %p417 = pneg %p231
      %p418 = pneg %p255
      %p419 = pneg %p252
      %p420 = pneg %p276
      %p421 = pneg %p273
      %p422 = pneg %p297
      %p423 = pneg %p294
      %p424 = pneg %p323
      %p425 = pneg %p320
      %p426 = scmp.lt.s32.totalorder %s24, 1
      %s427 = scalar_select %p426, %s24, 1
      %s428 = smul.addr %s427, 4
      %s429 = scalar_lea.vmem %s13, %s428
      %p430 = scmp.lt.s32.totalorder %s24, 1
      %s431 = scalar_select %p430, %s24, 1
      %s432 = smul.addr %s431, 16
      %s433 = smul.addr %s432, 4
      %s434 = scalar_lea.vmem %s0, %s433
      %p435 = scmp.lt.s32.totalorder %s24, 1
      %s436 = scalar_select %p435, %s24, 1
      %s437 = smul.addr %s436, 4
      %s438 = scalar_lea.vmem %s13, %s437
      %v440 = vld [vmem:[%s434] sm:$0xff]
      %v441 = vld [vmem:[%s434 + $0x8] sm:$0xff]
      %v442 = vld [vmem:[%s434 + $0x10] sm:$0xff]
      %v443 = vld [vmem:[%s434 + $0x18] sm:$0xff]
      %v444 = vld [vmem:[%s434 + $0x20] sm:$0xff]
      %v445 = vld [vmem:[%s434 + $0x28] sm:$0xff]
      %v446 = vld [vmem:[%s434 + $0x30] sm:$0xff]
      %v447 = vld [vmem:[%s434 + $0x38] sm:$0xff]
      %v448 = vld [vmem:[%s1] sm:$0xf]
      %v449 = vld [vmem:[%s1 + $0x4] sm:$0xf]
      %v450 = vld [vmem:[%s1 + $0x8] sm:$0xf]
      %v451 = vld [vmem:[%s1 + $0xc] sm:$0xf]
      %v456 = vunpack.c.l.b16 %v448
      %v457 = vunpack.c.l.b16 %v449
      %v458 = vunpack.c.l.b16 %v450
      %v459 = vunpack.c.l.b16 %v451
      %v460 = vpack.c.b16 %v457, %v456
      %v461 = vpack.c.b16 %v459, %v458
      %v470 = vunpack.c.l.b16 %v440
      %v471 = vunpack.c.h.b16 %v440
      %v472 = vunpack.c.l.b16 %v441
      %v473 = vunpack.c.h.b16 %v441
      %v474 = vunpack.c.l.b16 %v442
      %v475 = vunpack.c.h.b16 %v442
      %v476 = vunpack.c.l.b16 %v443
      %v477 = vunpack.c.h.b16 %v443
      %v478 = vunpack.c.l.b16 %v444
      %v479 = vunpack.c.h.b16 %v444
      %v480 = vunpack.c.l.b16 %v445
      %v481 = vunpack.c.h.b16 %v445
      %v482 = vunpack.c.l.b16 %v446
      %v483 = vunpack.c.h.b16 %v446
      %v484 = vunpack.c.l.b16 %v447
      %v485 = vunpack.c.h.b16 %v447
      %v486 = vpack.c.b16 %v472, %v470
      %v487 = vpack.c.b16 %v473, %v471
      %v488 = vpack.c.b16 %v476, %v474
      %v489 = vpack.c.b16 %v477, %v475
      %v490 = vpack.c.b16 %v480, %v478
      %v491 = vpack.c.b16 %v481, %v479
      %v492 = vpack.c.b16 %v484, %v482
      %v493 = vpack.c.b16 %v485, %v483
      %vm502 = vcmask 523264
      %v504 = vsel %vm502, %v460, 0
      %v507 = vsel %vm502, %v461, 0
      %509 = vmatpush.bf16.msra.mxu0 0
      %510 = vmatpush.bf16.msra.mxu0 0
      %511 = vmatpush.bf16.msra.mxu0 0
      %512 = vmatpush.bf16.msra.mxu0 0
      %513 = vmatpush.bf16.msra.mxu0 %v492
      %514 = vmatpush.bf16.msra.mxu0 %v490
      %515 = vmatpush.bf16.msra.mxu0 %v488
      %516 = vmatpush.bf16.msra.mxu0 %v486
      %517 = vmatmul.bf16.gmra.mxu0 %v504
      %v518 = vpop.f32.mrf.mxu0
      %v519 = vadd.f32 0.0, %v518
      %v520 = vpop.f32.mrf.mxu0
      %v521 = vadd.f32 0.0, %v520
      %522 = vmatmul.bf16.gmra.mxu0 %v507
      %v523 = vpop.f32.mrf.mxu0
      %v524 = vadd.f32 0.0, %v523
      %v525 = vpop.f32.mrf.mxu0
      %v526 = vadd.f32 0.0, %v525
      %527 = vdwg.mxu0
      %528 = vmatpush.bf16.msra.mxu0 0
      %529 = vmatpush.bf16.msra.mxu0 0
      %530 = vmatpush.bf16.msra.mxu0 0
      %531 = vmatpush.bf16.msra.mxu0 0
      %532 = vmatpush.bf16.msra.mxu0 %v493
      %533 = vmatpush.bf16.msra.mxu0 %v491
      %534 = vmatpush.bf16.msra.mxu0 %v489
      %535 = vmatpush.bf16.msra.mxu0 %v487
      %536 = vmatmul.bf16.gmra.mxu0 %v504
      %v537 = vpop.f32.mrf.mxu0
      %v538 = vadd.f32 0.0, %v537
      %v539 = vpop.f32.mrf.mxu0
      %v540 = vadd.f32 0.0, %v539
      %541 = vmatmul.bf16.gmra.mxu0 %v507
      %v542 = vpop.f32.mrf.mxu0
      %v543 = vadd.f32 0.0, %v542
      %v544 = vpop.f32.mrf.mxu0
      %v545 = vadd.f32 0.0, %v544
      %546 = vdwg.mxu0
      %v547 = vpack.c.bf16 %v521, %v519
      %v548 = vpack.c.bf16 %v540, %v538
      %v549 = vpack.c.bf16 %v526, %v524
      %v550 = vpack.c.bf16 %v545, %v543
      %v551 = vld [vmem:[%s2] sm:$0xf]
      %v552 = vld [vmem:[%s2 + $0x4] sm:$0xf]
      %v553 = vld [vmem:[%s2 + $0x8] sm:$0xf]
      %v554 = vld [vmem:[%s2 + $0xc] sm:$0xf]
      %v555 = vld [vmem:[%s2 + $0x10] sm:$0xf]
      %v556 = vld [vmem:[%s2 + $0x14] sm:$0xf]
      %v557 = vld [vmem:[%s2 + $0x18] sm:$0xf]
      %v558 = vld [vmem:[%s2 + $0x1c] sm:$0xf]
      %v559 = vld [vmem:[%s2 + $0x20] sm:$0xf]
      %v560 = vld [vmem:[%s2 + $0x24] sm:$0xf]
      %v561 = vld [vmem:[%s2 + $0x28] sm:$0xf]
      %v562 = vld [vmem:[%s2 + $0x2c] sm:$0xf]
      %v563 = vld [vmem:[%s2 + $0x30] sm:$0xf]
      %v564 = vld [vmem:[%s2 + $0x34] sm:$0xf]
      %v565 = vld [vmem:[%s2 + $0x38] sm:$0xf]
      %v566 = vld [vmem:[%s2 + $0x3c] sm:$0xf]
      %v567 = vld [vmem:[%s2 + $0x40] sm:$0xf]
      %v568 = vld [vmem:[%s2 + $0x44] sm:$0xf]
      %v569 = vld [vmem:[%s2 + $0x48] sm:$0xf]
      %v570 = vld [vmem:[%s2 + $0x4c] sm:$0xf]
      %v571 = vld [vmem:[%s2 + $0x50] sm:$0xf]
      %v572 = vld [vmem:[%s2 + $0x54] sm:$0xf]
      %v573 = vld [vmem:[%s2 + $0x58] sm:$0xf]
      %v574 = vld [vmem:[%s2 + $0x5c] sm:$0xf]
      %s575 = scalar_lea.vmem %s1, 16
      %v576 = vld [vmem:[%s575] sm:$0xf]
      %v577 = vld [vmem:[%s575 + $0x4] sm:$0xf]
      %v578 = vld [vmem:[%s575 + $0x8] sm:$0xf]
      %v579 = vld [vmem:[%s575 + $0xc] sm:$0xf]
      %v584 = vunpack.c.l.b16 %v576
      %v585 = vunpack.c.l.b16 %v577
      %v586 = vunpack.c.l.b16 %v578
      %v587 = vunpack.c.l.b16 %v579
      %v588 = vpack.c.b16 %v585, %v584
      %v589 = vpack.c.b16 %v587, %v586
      %v591 = vsel %vm502, %v588, 0
      %v594 = vsel %vm502, %v589, 0
      %596 = vmatpush.bf16.msra.mxu0 0
      %597 = vmatpush.bf16.msra.mxu0 0
      %598 = vmatpush.bf16.msra.mxu0 0
      %599 = vmatpush.bf16.msra.mxu0 0
      %600 = vmatpush.bf16.msra.mxu0 %v492
      %601 = vmatpush.bf16.msra.mxu0 %v490
      %602 = vmatpush.bf16.msra.mxu0 %v488
      %603 = vmatpush.bf16.msra.mxu0 %v486
      %604 = vmatmul.bf16.gmra.mxu0 %v591
      %v605 = vpop.f32.mrf.mxu0
      %v606 = vadd.f32 0.0, %v605
      %v607 = vpop.f32.mrf.mxu0
      %v608 = vadd.f32 0.0, %v607
      %609 = vmatmul.bf16.gmra.mxu0 %v594
      %v610 = vpop.f32.mrf.mxu0
      %v611 = vadd.f32 0.0, %v610
      %v612 = vpop.f32.mrf.mxu0
      %v613 = vadd.f32 0.0, %v612
      %614 = vdwg.mxu0
      %615 = vmatpush.bf16.msra.mxu0 0
      %616 = vmatpush.bf16.msra.mxu0 0
      %617 = vmatpush.bf16.msra.mxu0 0
      %618 = vmatpush.bf16.msra.mxu0 0
      %619 = vmatpush.bf16.msra.mxu0 %v493
      %620 = vmatpush.bf16.msra.mxu0 %v491
      %621 = vmatpush.bf16.msra.mxu0 %v489
      %622 = vmatpush.bf16.msra.mxu0 %v487
      %623 = vmatmul.bf16.gmra.mxu0 %v591
      %v624 = vpop.f32.mrf.mxu0
      %v625 = vadd.f32 0.0, %v624
      %v626 = vpop.f32.mrf.mxu0
      %v627 = vadd.f32 0.0, %v626
      %628 = vmatmul.bf16.gmra.mxu0 %v594
      %v629 = vpop.f32.mrf.mxu0
      %v630 = vadd.f32 0.0, %v629
      %v631 = vpop.f32.mrf.mxu0
      %v632 = vadd.f32 0.0, %v631
      %633 = vdwg.mxu0
      %v634 = vpack.c.bf16 %v608, %v606
      %v635 = vpack.c.bf16 %v627, %v625
      %v636 = vpack.c.bf16 %v613, %v611
      %v637 = vpack.c.bf16 %v632, %v630
      %s638 = scalar_lea.vmem %s2, 96
      %v639 = vld [vmem:[%s638] sm:$0xf]
      %v640 = vld [vmem:[%s638 + $0x4] sm:$0xf]
      %v641 = vld [vmem:[%s638 + $0x8] sm:$0xf]
      %v642 = vld [vmem:[%s638 + $0xc] sm:$0xf]
      %v643 = vld [vmem:[%s638 + $0x10] sm:$0xf]
      %v644 = vld [vmem:[%s638 + $0x14] sm:$0xf]
      %v645 = vld [vmem:[%s638 + $0x18] sm:$0xf]
      %v646 = vld [vmem:[%s638 + $0x1c] sm:$0xf]
      %v647 = vld [vmem:[%s638 + $0x20] sm:$0xf]
      %v648 = vld [vmem:[%s638 + $0x24] sm:$0xf]
      %v649 = vld [vmem:[%s638 + $0x28] sm:$0xf]
      %v650 = vld [vmem:[%s638 + $0x2c] sm:$0xf]
      %v651 = vld [vmem:[%s638 + $0x30] sm:$0xf]
      %v652 = vld [vmem:[%s638 + $0x34] sm:$0xf]
      %v653 = vld [vmem:[%s638 + $0x38] sm:$0xf]
      %v654 = vld [vmem:[%s638 + $0x3c] sm:$0xf]
      %v655 = vld [vmem:[%s638 + $0x40] sm:$0xf]
      %v656 = vld [vmem:[%s638 + $0x44] sm:$0xf]
      %v657 = vld [vmem:[%s638 + $0x48] sm:$0xf]
      %v658 = vld [vmem:[%s638 + $0x4c] sm:$0xf]
      %v659 = vld [vmem:[%s638 + $0x50] sm:$0xf]
      %v660 = vld [vmem:[%s638 + $0x54] sm:$0xf]
      %v661 = vld [vmem:[%s638 + $0x58] sm:$0xf]
      %v662 = vld [vmem:[%s638 + $0x5c] sm:$0xf]
      %v687 = vunpack.c.l.b16 %v639
      %v688 = vunpack.c.l.b16 %v640
      %v689 = vunpack.c.l.b16 %v641
      %v690 = vunpack.c.l.b16 %v642
      %v691 = vunpack.c.l.b16 %v643
      %v692 = vunpack.c.l.b16 %v644
      %v693 = vunpack.c.l.b16 %v645
      %v694 = vunpack.c.l.b16 %v646
      %v695 = vunpack.c.l.b16 %v647
      %v696 = vunpack.c.l.b16 %v648
      %v697 = vunpack.c.l.b16 %v649
      %v698 = vunpack.c.l.b16 %v650
      %v699 = vunpack.c.l.b16 %v651
      %v700 = vunpack.c.l.b16 %v652
      %v701 = vunpack.c.l.b16 %v653
      %v702 = vunpack.c.l.b16 %v654
      %v703 = vunpack.c.l.b16 %v655
      %v704 = vunpack.c.l.b16 %v656
      %v705 = vunpack.c.l.b16 %v657
      %v706 = vunpack.c.l.b16 %v658
      %v707 = vunpack.c.l.b16 %v659
      %v708 = vunpack.c.l.b16 %v660
      %v709 = vunpack.c.l.b16 %v661
      %v710 = vunpack.c.l.b16 %v662
      %v711 = vpack.c.b16 %v688, %v687
      %v712 = vpack.c.b16 %v690, %v689
      %v713 = vpack.c.b16 %v692, %v691
      %v714 = vpack.c.b16 %v694, %v693
      %v715 = vpack.c.b16 %v696, %v695
      %v716 = vpack.c.b16 %v698, %v697
      %v717 = vpack.c.b16 %v700, %v699
      %v718 = vpack.c.b16 %v702, %v701
      %v719 = vpack.c.b16 %v704, %v703
      %v720 = vpack.c.b16 %v706, %v705
      %v721 = vpack.c.b16 %v708, %v707
      %v722 = vpack.c.b16 %v710, %v709
      %v736 = vsel %vm502, %v635, 0
      %v739 = vsel %vm502, %v637, 0
      %741 = vmatpush.bf16.msra.mxu0 %v718
      %742 = vmatpush.bf16.msra.mxu0 %v717
      %743 = vmatpush.bf16.msra.mxu0 %v716
      %744 = vmatpush.bf16.msra.mxu0 %v715
      %745 = vmatpush.bf16.msra.mxu0 %v714
      %746 = vmatpush.bf16.msra.mxu0 %v713
      %747 = vmatpush.bf16.msra.mxu0 %v712
      %748 = vmatpush.bf16.msra.mxu0 %v711
      %749 = vmatmul.bf16.gmra.mxu0 %v634
      %v750 = vpop.f32.mrf.mxu0
      %v751 = vadd.f32 0.0, %v750
      %v752 = vpop.f32.mrf.mxu0
      %v753 = vadd.f32 0.0, %v752
      %754 = vmatmul.bf16.gmra.mxu0 %v636
      %v755 = vpop.f32.mrf.mxu0
      %v756 = vadd.f32 0.0, %v755
      %v757 = vpop.f32.mrf.mxu0
      %v758 = vadd.f32 0.0, %v757
      %759 = vdwg.mxu0
      %760 = vmatpush.bf16.msra.mxu0 0
      %761 = vmatpush.bf16.msra.mxu0 0
      %762 = vmatpush.bf16.msra.mxu0 0
      %763 = vmatpush.bf16.msra.mxu0 0
      %764 = vmatpush.bf16.msra.mxu0 %v722
      %765 = vmatpush.bf16.msra.mxu0 %v721
      %766 = vmatpush.bf16.msra.mxu0 %v720
      %767 = vmatpush.bf16.msra.mxu0 %v719
      %768 = vmatmul.bf16.gmra.mxu0 %v736
      %v769 = vpop.f32.mrf.mxu0
      %v770 = vadd.f32 %v751, %v769
      %v771 = vpop.f32.mrf.mxu0
      %v772 = vadd.f32 %v753, %v771
      %773 = vmatmul.bf16.gmra.mxu0 %v739
      %v774 = vpop.f32.mrf.mxu0
      %v775 = vadd.f32 %v756, %v774
      %v776 = vpop.f32.mrf.mxu0
      %v777 = vadd.f32 %v758, %v776
      %778 = vdwg.mxu0
      %v803 = vunpack.c.l.b16 %v551
      %v804 = vunpack.c.l.b16 %v552
      %v805 = vunpack.c.l.b16 %v553
      %v806 = vunpack.c.l.b16 %v554
      %v807 = vunpack.c.l.b16 %v555
      %v808 = vunpack.c.l.b16 %v556
      %v809 = vunpack.c.l.b16 %v557
      %v810 = vunpack.c.l.b16 %v558
      %v811 = vunpack.c.l.b16 %v559
      %v812 = vunpack.c.l.b16 %v560
      %v813 = vunpack.c.l.b16 %v561
      %v814 = vunpack.c.l.b16 %v562
      %v815 = vunpack.c.l.b16 %v563
      %v816 = vunpack.c.l.b16 %v564
      %v817 = vunpack.c.l.b16 %v565
      %v818 = vunpack.c.l.b16 %v566
      %v819 = vunpack.c.l.b16 %v567
      %v820 = vunpack.c.l.b16 %v568
      %v821 = vunpack.c.l.b16 %v569
      %v822 = vunpack.c.l.b16 %v570
      %v823 = vunpack.c.l.b16 %v571
      %v824 = vunpack.c.l.b16 %v572
      %v825 = vunpack.c.l.b16 %v573
      %v826 = vunpack.c.l.b16 %v574
      %v827 = vpack.c.b16 %v804, %v803
      %v828 = vpack.c.b16 %v806, %v805
      %v829 = vpack.c.b16 %v808, %v807
      %v830 = vpack.c.b16 %v810, %v809
      %v831 = vpack.c.b16 %v812, %v811
      %v832 = vpack.c.b16 %v814, %v813
      %v833 = vpack.c.b16 %v816, %v815
      %v834 = vpack.c.b16 %v818, %v817
      %v835 = vpack.c.b16 %v820, %v819
      %v836 = vpack.c.b16 %v822, %v821
      %v837 = vpack.c.b16 %v824, %v823
      %v838 = vpack.c.b16 %v826, %v825
      %v852 = vsel %vm502, %v548, 0
      %v855 = vsel %vm502, %v550, 0
      %857 = vmatpush.bf16.msra.mxu0 %v834
      %858 = vmatpush.bf16.msra.mxu0 %v833
      %859 = vmatpush.bf16.msra.mxu0 %v832
      %860 = vmatpush.bf16.msra.mxu0 %v831
      %861 = vmatpush.bf16.msra.mxu0 %v830
      %862 = vmatpush.bf16.msra.mxu0 %v829
      %863 = vmatpush.bf16.msra.mxu0 %v828
      %864 = vmatpush.bf16.msra.mxu0 %v827
      %865 = vmatmul.bf16.gmra.mxu0 %v547
      %v866 = vpop.f32.mrf.mxu0
      %v867 = vadd.f32 %v770, %v866
      %v868 = vpop.f32.mrf.mxu0
      %v869 = vadd.f32 %v772, %v868
      %870 = vmatmul.bf16.gmra.mxu0 %v549
      %v871 = vpop.f32.mrf.mxu0
      %v872 = vadd.f32 %v775, %v871
      %v873 = vpop.f32.mrf.mxu0
      %v874 = vadd.f32 %v777, %v873
      %875 = vdwg.mxu0
      %876 = vmatpush.bf16.msra.mxu0 0
      %877 = vmatpush.bf16.msra.mxu0 0
      %878 = vmatpush.bf16.msra.mxu0 0
      %879 = vmatpush.bf16.msra.mxu0 0
      %880 = vmatpush.bf16.msra.mxu0 %v838
      %881 = vmatpush.bf16.msra.mxu0 %v837
      %882 = vmatpush.bf16.msra.mxu0 %v836
      %883 = vmatpush.bf16.msra.mxu0 %v835
      %884 = vmatmul.bf16.gmra.mxu0 %v852
      %v885 = vpop.f32.mrf.mxu0
      %v886 = vadd.f32 %v867, %v885
      %v887 = vpop.f32.mrf.mxu0
      %v888 = vadd.f32 %v869, %v887
      %889 = vmatmul.bf16.gmra.mxu0 %v855
      %v890 = vpop.f32.mrf.mxu0
      %v891 = vadd.f32 %v872, %v890
      %v892 = vpop.f32.mrf.mxu0
      %v893 = vadd.f32 %v874, %v892
      %894 = vdwg.mxu0
      %s895 = scalar_lea.vmem %s1, 32
      %v896 = vld [vmem:[%s895] sm:$0xf]
      %v897 = vld [vmem:[%s895 + $0x4] sm:$0xf]
      %v898 = vld [vmem:[%s895 + $0x8] sm:$0xf]
      %v899 = vld [vmem:[%s895 + $0xc] sm:$0xf]
      %v904 = vunpack.c.l.b16 %v896
      %v905 = vunpack.c.l.b16 %v897
      %v906 = vunpack.c.l.b16 %v898
      %v907 = vunpack.c.l.b16 %v899
      %v908 = vpack.c.b16 %v905, %v904
      %v909 = vpack.c.b16 %v907, %v906
      %v911 = vsel %vm502, %v908, 0
      %v914 = vsel %vm502, %v909, 0
      %916 = vmatpush.bf16.msra.mxu0 0
      %917 = vmatpush.bf16.msra.mxu0 0
      %918 = vmatpush.bf16.msra.mxu0 0
      %919 = vmatpush.bf16.msra.mxu0 0
      %920 = vmatpush.bf16.msra.mxu0 %v492
      %921 = vmatpush.bf16.msra.mxu0 %v490
      %922 = vmatpush.bf16.msra.mxu0 %v488
      %923 = vmatpush.bf16.msra.mxu0 %v486
      %924 = vmatmul.bf16.gmra.mxu0 %v911
      %v925 = vpop.f32.mrf.mxu0
      %v926 = vadd.f32 0.0, %v925
      %v927 = vpop.f32.mrf.mxu0
      %v928 = vadd.f32 0.0, %v927
      %929 = vmatmul.bf16.gmra.mxu0 %v914
      %v930 = vpop.f32.mrf.mxu0
      %v931 = vadd.f32 0.0, %v930
      %v932 = vpop.f32.mrf.mxu0
      %v933 = vadd.f32 0.0, %v932
      %934 = vdwg.mxu0
      %935 = vmatpush.bf16.msra.mxu0 0
      %936 = vmatpush.bf16.msra.mxu0 0
      %937 = vmatpush.bf16.msra.mxu0 0
      %938 = vmatpush.bf16.msra.mxu0 0
      %939 = vmatpush.bf16.msra.mxu0 %v493
      %940 = vmatpush.bf16.msra.mxu0 %v491
      %941 = vmatpush.bf16.msra.mxu0 %v489
      %942 = vmatpush.bf16.msra.mxu0 %v487
      %943 = vmatmul.bf16.gmra.mxu0 %v911
      %v944 = vpop.f32.mrf.mxu0
      %v945 = vadd.f32 0.0, %v944
      %v946 = vpop.f32.mrf.mxu0
      %v947 = vadd.f32 0.0, %v946
      %948 = vmatmul.bf16.gmra.mxu0 %v914
      %v949 = vpop.f32.mrf.mxu0
      %v950 = vadd.f32 0.0, %v949
      %v951 = vpop.f32.mrf.mxu0
      %v952 = vadd.f32 0.0, %v951
      %953 = vdwg.mxu0
      %v954 = vpack.c.bf16 %v928, %v926
      %v955 = vpack.c.bf16 %v947, %v945
      %v956 = vpack.c.bf16 %v933, %v931
      %v957 = vpack.c.bf16 %v952, %v950
      %s958 = scalar_lea.vmem %s2, 192
      %v959 = vld [vmem:[%s958] sm:$0xf]
      %v960 = vld [vmem:[%s958 + $0x4] sm:$0xf]
      %v961 = vld [vmem:[%s958 + $0x8] sm:$0xf]
      %v962 = vld [vmem:[%s958 + $0xc] sm:$0xf]
      %v963 = vld [vmem:[%s958 + $0x10] sm:$0xf]
      %v964 = vld [vmem:[%s958 + $0x14] sm:$0xf]
      %v965 = vld [vmem:[%s958 + $0x18] sm:$0xf]
      %v966 = vld [vmem:[%s958 + $0x1c] sm:$0xf]
      %v967 = vld [vmem:[%s958 + $0x20] sm:$0xf]
      %v968 = vld [vmem:[%s958 + $0x24] sm:$0xf]
      %v969 = vld [vmem:[%s958 + $0x28] sm:$0xf]
      %v970 = vld [vmem:[%s958 + $0x2c] sm:$0xf]
      %v971 = vld [vmem:[%s958 + $0x30] sm:$0xf]
      %v972 = vld [vmem:[%s958 + $0x34] sm:$0xf]
      %v973 = vld [vmem:[%s958 + $0x38] sm:$0xf]
      %v974 = vld [vmem:[%s958 + $0x3c] sm:$0xf]
      %v975 = vld [vmem:[%s958 + $0x40] sm:$0xf]
      %v976 = vld [vmem:[%s958 + $0x44] sm:$0xf]
      %v977 = vld [vmem:[%s958 + $0x48] sm:$0xf]
      %v978 = vld [vmem:[%s958 + $0x4c] sm:$0xf]
      %v979 = vld [vmem:[%s958 + $0x50] sm:$0xf]
      %v980 = vld [vmem:[%s958 + $0x54] sm:$0xf]
      %v981 = vld [vmem:[%s958 + $0x58] sm:$0xf]
      %v982 = vld [vmem:[%s958 + $0x5c] sm:$0xf]
      %v1007 = vunpack.c.l.b16 %v959
      %v1008 = vunpack.c.l.b16 %v960
      %v1009 = vunpack.c.l.b16 %v961
      %v1010 = vunpack.c.l.b16 %v962
      %v1011 = vunpack.c.l.b16 %v963
      %v1012 = vunpack.c.l.b16 %v964
      %v1013 = vunpack.c.l.b16 %v965
      %v1014 = vunpack.c.l.b16 %v966
      %v1015 = vunpack.c.l.b16 %v967
      %v1016 = vunpack.c.l.b16 %v968
      %v1017 = vunpack.c.l.b16 %v969
      %v1018 = vunpack.c.l.b16 %v970
      %v1019 = vunpack.c.l.b16 %v971
      %v1020 = vunpack.c.l.b16 %v972
      %v1021 = vunpack.c.l.b16 %v973
      %v1022 = vunpack.c.l.b16 %v974
      %v1023 = vunpack.c.l.b16 %v975
      %v1024 = vunpack.c.l.b16 %v976
      %v1025 = vunpack.c.l.b16 %v977
      %v1026 = vunpack.c.l.b16 %v978
      %v1027 = vunpack.c.l.b16 %v979
      %v1028 = vunpack.c.l.b16 %v980
      %v1029 = vunpack.c.l.b16 %v981
      %v1030 = vunpack.c.l.b16 %v982
      %v1031 = vpack.c.b16 %v1008, %v1007
      %v1032 = vpack.c.b16 %v1010, %v1009
      %v1033 = vpack.c.b16 %v1012, %v1011
      %v1034 = vpack.c.b16 %v1014, %v1013
      %v1035 = vpack.c.b16 %v1016, %v1015
      %v1036 = vpack.c.b16 %v1018, %v1017
      %v1037 = vpack.c.b16 %v1020, %v1019
      %v1038 = vpack.c.b16 %v1022, %v1021
      %v1039 = vpack.c.b16 %v1024, %v1023
      %v1040 = vpack.c.b16 %v1026, %v1025
      %v1041 = vpack.c.b16 %v1028, %v1027
      %v1042 = vpack.c.b16 %v1030, %v1029
      %v1056 = vsel %vm502, %v955, 0
      %v1059 = vsel %vm502, %v957, 0
      %1061 = vmatpush.bf16.msra.mxu0 %v1038
      %1062 = vmatpush.bf16.msra.mxu0 %v1037
      %1063 = vmatpush.bf16.msra.mxu0 %v1036
      %1064 = vmatpush.bf16.msra.mxu0 %v1035
      %1065 = vmatpush.bf16.msra.mxu0 %v1034
      %1066 = vmatpush.bf16.msra.mxu0 %v1033
      %1067 = vmatpush.bf16.msra.mxu0 %v1032
      %1068 = vmatpush.bf16.msra.mxu0 %v1031
      %1069 = vmatmul.bf16.gmra.mxu0 %v954
      %v1070 = vpop.f32.mrf.mxu0
      %v1071 = vadd.f32 0.0, %v1070
      %v1072 = vpop.f32.mrf.mxu0
      %v1073 = vadd.f32 0.0, %v1072
      %1074 = vmatmul.bf16.gmra.mxu0 %v956
      %v1075 = vpop.f32.mrf.mxu0
      %v1076 = vadd.f32 0.0, %v1075
      %v1077 = vpop.f32.mrf.mxu0
      %v1078 = vadd.f32 0.0, %v1077
      %1079 = vdwg.mxu0
      %1080 = vmatpush.bf16.msra.mxu0 0
      %1081 = vmatpush.bf16.msra.mxu0 0
      %1082 = vmatpush.bf16.msra.mxu0 0
      %1083 = vmatpush.bf16.msra.mxu0 0
      %1084 = vmatpush.bf16.msra.mxu0 %v1042
      %1085 = vmatpush.bf16.msra.mxu0 %v1041
      %1086 = vmatpush.bf16.msra.mxu0 %v1040
      %1087 = vmatpush.bf16.msra.mxu0 %v1039
      %1088 = vmatmul.bf16.gmra.mxu0 %v1056
      %v1089 = vpop.f32.mrf.mxu0
      %v1090 = vadd.f32 %v1071, %v1089
      %v1091 = vpop.f32.mrf.mxu0
      %v1092 = vadd.f32 %v1073, %v1091
      %1093 = vmatmul.bf16.gmra.mxu0 %v1059
      %v1094 = vpop.f32.mrf.mxu0
      %v1095 = vadd.f32 %v1076, %v1094
      %v1096 = vpop.f32.mrf.mxu0
      %v1097 = vadd.f32 %v1078, %v1096
      %1098 = vdwg.mxu0
      %v1099 = vadd.f32 %v886, %v1090
      %v1100 = vadd.f32 %v888, %v1092
      %v1101 = vadd.f32 %v891, %v1095
      %v1102 = vadd.f32 %v893, %v1097
      %v1103 = vld [vmem:[%s3] sm:$0x1]
      %v1105 = vperm.slane %v1103, 0
      %v1107 = vadd.f32 %v1099, %v1105
      %v1108 = vadd.f32 %v1100, %v1105
      %v1109 = vadd.f32 %v1101, %v1105
      %v1110 = vadd.f32 %v1102, %v1105
      %vm1111 = vcmp.ge.f32.partialorder %v1107, 0.0
      %vm1112 = vcmp.ge.f32.partialorder %v1108, 0.0
      %vm1113 = vcmp.ge.f32.partialorder %v1109, 0.0
      %vm1114 = vcmp.ge.f32.partialorder %v1110, 0.0
      %v1115 = vmul.f32 %v1107, 0.2
      %v1116 = vmul.f32 %v1108, 0.2
      %v1117 = vmul.f32 %v1109, 0.2
      %v1118 = vmul.f32 %v1110, 0.2
      %v1119 = vsel %vm1111, %v1107, %v1115
      %v1120 = vsel %vm1112, %v1108, %v1116
      %v1121 = vsel %vm1113, %v1109, %v1117
      %v1122 = vsel %vm1114, %v1110, %v1118
      %v1123 = vpack.c.bf16 %v1120, %v1119
      %v1124 = vpack.c.bf16 %v1122, %v1121
      %v1125 = vld [vmem:[%s4] sm:$0xf]
      %v1126 = vld [vmem:[%s4 + $0x4] sm:$0xf]
      %v1129 = vunpack.c.l.b16 %v1125
      %v1130 = vunpack.c.l.b16 %v1126
      %v1131 = vpack.c.b16 %v1130, %v1129
      %vm1132 = vcmask 261120
      %v1134 = vsel %vm1132, %v1131, 0
      %1136 = vmatpush.bf16.msra.mxu0 0
      %1137 = vmatpush.bf16.msra.mxu0 0
      %1138 = vmatpush.bf16.msra.mxu0 0
      %1139 = vmatpush.bf16.msra.mxu0 0
      %1140 = vmatpush.bf16.msra.mxu0 0
      %1141 = vmatpush.bf16.msra.mxu0 0
      %1142 = vmatpush.bf16.msra.mxu0 %v1124
      %1143 = vmatpush.bf16.msra.mxu0 %v1123
      %1144 = vmatmul.bf16.gmra.mxu0 %v1134
      %v1145 = vpop.f32.mrf.mxu0
      %v1146 = vadd.f32 0.0, %v1145
      %v1147 = vpop.f32.mrf.mxu0
      %v1148 = vadd.f32 0.0, %v1147
      %1149 = vdwg.mxu0
      %v1150 = vpack.c.bf16 %v1148, %v1146
      %v1151 = vld [vmem:[%s5] sm:$0xf]
      %v1152 = vld [vmem:[%s5 + $0x4] sm:$0xf]
      %v1153 = vld [vmem:[%s5 + $0x8] sm:$0xf]
      %v1154 = vld [vmem:[%s5 + $0xc] sm:$0xf]
      %v1155 = vld [vmem:[%s5 + $0x10] sm:$0xf]
      %v1156 = vld [vmem:[%s5 + $0x14] sm:$0xf]
      %v1157 = vld [vmem:[%s5 + $0x18] sm:$0xf]
      %v1158 = vld [vmem:[%s5 + $0x1c] sm:$0xf]
      %v1159 = vld [vmem:[%s5 + $0x20] sm:$0xf]
      %v1160 = vld [vmem:[%s5 + $0x24] sm:$0xf]
      %v1161 = vld [vmem:[%s5 + $0x28] sm:$0xf]
      %v1162 = vld [vmem:[%s5 + $0x2c] sm:$0xf]
      %v1163 = vld [vmem:[%s5 + $0x30] sm:$0xf]
      %v1164 = vld [vmem:[%s5 + $0x34] sm:$0xf]
      %v1165 = vld [vmem:[%s5 + $0x38] sm:$0xf]
      %v1166 = vld [vmem:[%s5 + $0x3c] sm:$0xf]
      %s1167 = scalar_lea.vmem %s4, 8
      %v1168 = vld [vmem:[%s1167] sm:$0xf]
      %v1169 = vld [vmem:[%s1167 + $0x4] sm:$0xf]
      %v1172 = vunpack.c.l.b16 %v1168
      %v1173 = vunpack.c.l.b16 %v1169
      %v1174 = vpack.c.b16 %v1173, %v1172
      %v1176 = vsel %vm1132, %v1174, 0
      %1178 = vmatpush.bf16.msra.mxu0 0
      %1179 = vmatpush.bf16.msra.mxu0 0
      %1180 = vmatpush.bf16.msra.mxu0 0
      %1181 = vmatpush.bf16.msra.mxu0 0
      %1182 = vmatpush.bf16.msra.mxu0 0
      %1183 = vmatpush.bf16.msra.mxu0 0
      %1184 = vmatpush.bf16.msra.mxu0 %v1124
      %1185 = vmatpush.bf16.msra.mxu0 %v1123
      %1186 = vmatmul.bf16.gmra.mxu0 %v1176
      %v1187 = vpop.f32.mrf.mxu0
      %v1188 = vadd.f32 0.0, %v1187
      %v1189 = vpop.f32.mrf.mxu0
      %v1190 = vadd.f32 0.0, %v1189
      %1191 = vdwg.mxu0
      %v1192 = vpack.c.bf16 %v1190, %v1188
      %s1193 = scalar_lea.vmem %s5, 64
      %v1194 = vld [vmem:[%s1193] sm:$0xf]
      %v1195 = vld [vmem:[%s1193 + $0x4] sm:$0xf]
      %v1196 = vld [vmem:[%s1193 + $0x8] sm:$0xf]
      %v1197 = vld [vmem:[%s1193 + $0xc] sm:$0xf]
      %v1198 = vld [vmem:[%s1193 + $0x10] sm:$0xf]
      %v1199 = vld [vmem:[%s1193 + $0x14] sm:$0xf]
      %v1200 = vld [vmem:[%s1193 + $0x18] sm:$0xf]
      %v1201 = vld [vmem:[%s1193 + $0x1c] sm:$0xf]
      %v1202 = vld [vmem:[%s1193 + $0x20] sm:$0xf]
      %v1203 = vld [vmem:[%s1193 + $0x24] sm:$0xf]
      %v1204 = vld [vmem:[%s1193 + $0x28] sm:$0xf]
      %v1205 = vld [vmem:[%s1193 + $0x2c] sm:$0xf]
      %v1206 = vld [vmem:[%s1193 + $0x30] sm:$0xf]
      %v1207 = vld [vmem:[%s1193 + $0x34] sm:$0xf]
      %v1208 = vld [vmem:[%s1193 + $0x38] sm:$0xf]
      %v1209 = vld [vmem:[%s1193 + $0x3c] sm:$0xf]
      %v1226 = vunpack.c.l.b16 %v1194
      %v1227 = vunpack.c.l.b16 %v1195
      %v1228 = vunpack.c.l.b16 %v1196
      %v1229 = vunpack.c.l.b16 %v1197
      %v1230 = vunpack.c.l.b16 %v1198
      %v1231 = vunpack.c.l.b16 %v1199
      %v1232 = vunpack.c.l.b16 %v1200
      %v1233 = vunpack.c.l.b16 %v1201
      %v1234 = vunpack.c.l.b16 %v1202
      %v1235 = vunpack.c.l.b16 %v1203
      %v1236 = vunpack.c.l.b16 %v1204
      %v1237 = vunpack.c.l.b16 %v1205
      %v1238 = vunpack.c.l.b16 %v1206
      %v1239 = vunpack.c.l.b16 %v1207
      %v1240 = vunpack.c.l.b16 %v1208
      %v1241 = vunpack.c.l.b16 %v1209
      %v1242 = vpack.c.b16 %v1227, %v1226
      %v1243 = vpack.c.b16 %v1229, %v1228
      %v1244 = vpack.c.b16 %v1231, %v1230
      %v1245 = vpack.c.b16 %v1233, %v1232
      %v1246 = vpack.c.b16 %v1235, %v1234
      %v1247 = vpack.c.b16 %v1237, %v1236
      %v1248 = vpack.c.b16 %v1239, %v1238
      %v1249 = vpack.c.b16 %v1241, %v1240
      %1258 = vmatpush.bf16.msra.mxu0 %v1249
      %1259 = vmatpush.bf16.msra.mxu0 %v1248
      %1260 = vmatpush.bf16.msra.mxu0 %v1247
      %1261 = vmatpush.bf16.msra.mxu0 %v1246
      %1262 = vmatpush.bf16.msra.mxu0 %v1245
      %1263 = vmatpush.bf16.msra.mxu0 %v1244
      %1264 = vmatpush.bf16.msra.mxu0 %v1243
      %1265 = vmatpush.bf16.msra.mxu0 %v1242
      %1266 = vmatmul.bf16.gmra.mxu0 %v1192
      %v1267 = vpop.f32.mrf.mxu0
      %v1268 = vadd.f32 0.0, %v1267
      %v1269 = vpop.f32.mrf.mxu0
      %v1270 = vadd.f32 0.0, %v1269
      %1271 = vdwg.mxu0
      %v1288 = vunpack.c.l.b16 %v1151
      %v1289 = vunpack.c.l.b16 %v1152
      %v1290 = vunpack.c.l.b16 %v1153
      %v1291 = vunpack.c.l.b16 %v1154
      %v1292 = vunpack.c.l.b16 %v1155
      %v1293 = vunpack.c.l.b16 %v1156
      %v1294 = vunpack.c.l.b16 %v1157
      %v1295 = vunpack.c.l.b16 %v1158
      %v1296 = vunpack.c.l.b16 %v1159
      %v1297 = vunpack.c.l.b16 %v1160
      %v1298 = vunpack.c.l.b16 %v1161
      %v1299 = vunpack.c.l.b16 %v1162
      %v1300 = vunpack.c.l.b16 %v1163
      %v1301 = vunpack.c.l.b16 %v1164
      %v1302 = vunpack.c.l.b16 %v1165
      %v1303 = vunpack.c.l.b16 %v1166
      %v1304 = vpack.c.b16 %v1289, %v1288
      %v1305 = vpack.c.b16 %v1291, %v1290
      %v1306 = vpack.c.b16 %v1293, %v1292
      %v1307 = vpack.c.b16 %v1295, %v1294
      %v1308 = vpack.c.b16 %v1297, %v1296
      %v1309 = vpack.c.b16 %v1299, %v1298
      %v1310 = vpack.c.b16 %v1301, %v1300
      %v1311 = vpack.c.b16 %v1303, %v1302
      %1320 = vmatpush.bf16.msra.mxu0 %v1311
      %1321 = vmatpush.bf16.msra.mxu0 %v1310
      %1322 = vmatpush.bf16.msra.mxu0 %v1309
      %1323 = vmatpush.bf16.msra.mxu0 %v1308
      %1324 = vmatpush.bf16.msra.mxu0 %v1307
      %1325 = vmatpush.bf16.msra.mxu0 %v1306
      %1326 = vmatpush.bf16.msra.mxu0 %v1305
      %1327 = vmatpush.bf16.msra.mxu0 %v1304
      %1328 = vmatmul.bf16.gmra.mxu0 %v1150
      %v1329 = vpop.f32.mrf.mxu0
      %v1330 = vadd.f32 %v1268, %v1329
      %v1331 = vpop.f32.mrf.mxu0
      %v1332 = vadd.f32 %v1270, %v1331
      %1333 = vdwg.mxu0
      %s1334 = scalar_lea.vmem %s4, 16
      %v1335 = vld [vmem:[%s1334] sm:$0xf]
      %v1336 = vld [vmem:[%s1334 + $0x4] sm:$0xf]
      %v1339 = vunpack.c.l.b16 %v1335
      %v1340 = vunpack.c.l.b16 %v1336
      %v1341 = vpack.c.b16 %v1340, %v1339
      %v1343 = vsel %vm1132, %v1341, 0
      %1345 = vmatpush.bf16.msra.mxu0 0
      %1346 = vmatpush.bf16.msra.mxu0 0
      %1347 = vmatpush.bf16.msra.mxu0 0
      %1348 = vmatpush.bf16.msra.mxu0 0
      %1349 = vmatpush.bf16.msra.mxu0 0
      %1350 = vmatpush.bf16.msra.mxu0 0
      %1351 = vmatpush.bf16.msra.mxu0 %v1124
      %1352 = vmatpush.bf16.msra.mxu0 %v1123
      %1353 = vmatmul.bf16.gmra.mxu0 %v1343
      %v1354 = vpop.f32.mrf.mxu0
      %v1355 = vadd.f32 0.0, %v1354
      %v1356 = vpop.f32.mrf.mxu0
      %v1357 = vadd.f32 0.0, %v1356
      %1358 = vdwg.mxu0
      %v1359 = vpack.c.bf16 %v1357, %v1355
      %s1360 = scalar_lea.vmem %s5, 128
      %v1361 = vld [vmem:[%s1360] sm:$0xf]
      %v1362 = vld [vmem:[%s1360 + $0x4] sm:$0xf]
      %v1363 = vld [vmem:[%s1360 + $0x8] sm:$0xf]
      %v1364 = vld [vmem:[%s1360 + $0xc] sm:$0xf]
      %v1365 = vld [vmem:[%s1360 + $0x10] sm:$0xf]
      %v1366 = vld [vmem:[%s1360 + $0x14] sm:$0xf]
      %v1367 = vld [vmem:[%s1360 + $0x18] sm:$0xf]
      %v1368 = vld [vmem:[%s1360 + $0x1c] sm:$0xf]
      %v1369 = vld [vmem:[%s1360 + $0x20] sm:$0xf]
      %v1370 = vld [vmem:[%s1360 + $0x24] sm:$0xf]
      %v1371 = vld [vmem:[%s1360 + $0x28] sm:$0xf]
      %v1372 = vld [vmem:[%s1360 + $0x2c] sm:$0xf]
      %v1373 = vld [vmem:[%s1360 + $0x30] sm:$0xf]
      %v1374 = vld [vmem:[%s1360 + $0x34] sm:$0xf]
      %v1375 = vld [vmem:[%s1360 + $0x38] sm:$0xf]
      %v1376 = vld [vmem:[%s1360 + $0x3c] sm:$0xf]
      %v1393 = vunpack.c.l.b16 %v1361
      %v1394 = vunpack.c.l.b16 %v1362
      %v1395 = vunpack.c.l.b16 %v1363
      %v1396 = vunpack.c.l.b16 %v1364
      %v1397 = vunpack.c.l.b16 %v1365
      %v1398 = vunpack.c.l.b16 %v1366
      %v1399 = vunpack.c.l.b16 %v1367
      %v1400 = vunpack.c.l.b16 %v1368
      %v1401 = vunpack.c.l.b16 %v1369
      %v1402 = vunpack.c.l.b16 %v1370
      %v1403 = vunpack.c.l.b16 %v1371
      %v1404 = vunpack.c.l.b16 %v1372
      %v1405 = vunpack.c.l.b16 %v1373
      %v1406 = vunpack.c.l.b16 %v1374
      %v1407 = vunpack.c.l.b16 %v1375
      %v1408 = vunpack.c.l.b16 %v1376
      %v1409 = vpack.c.b16 %v1394, %v1393
      %v1410 = vpack.c.b16 %v1396, %v1395
      %v1411 = vpack.c.b16 %v1398, %v1397
      %v1412 = vpack.c.b16 %v1400, %v1399
      %v1413 = vpack.c.b16 %v1402, %v1401
      %v1414 = vpack.c.b16 %v1404, %v1403
      %v1415 = vpack.c.b16 %v1406, %v1405
      %v1416 = vpack.c.b16 %v1408, %v1407
      %1425 = vmatpush.bf16.msra.mxu0 %v1416
      %1426 = vmatpush.bf16.msra.mxu0 %v1415
      %1427 = vmatpush.bf16.msra.mxu0 %v1414
      %1428 = vmatpush.bf16.msra.mxu0 %v1413
      %1429 = vmatpush.bf16.msra.mxu0 %v1412
      %1430 = vmatpush.bf16.msra.mxu0 %v1411
      %1431 = vmatpush.bf16.msra.mxu0 %v1410
      %1432 = vmatpush.bf16.msra.mxu0 %v1409
      %1433 = vmatmul.bf16.gmra.mxu0 %v1359
      %v1434 = vpop.f32.mrf.mxu0
      %v1435 = vadd.f32 0.0, %v1434
      %v1436 = vpop.f32.mrf.mxu0
      %v1437 = vadd.f32 0.0, %v1436
      %1438 = vdwg.mxu0
      %v1439 = vadd.f32 %v1330, %v1435
      %v1440 = vadd.f32 %v1332, %v1437
      %v1441 = vld [vmem:[%s6] sm:$0x1]
      %v1443 = vperm.slane %v1441, 0
      %v1445 = vadd.f32 %v1439, %v1443
      %v1446 = vadd.f32 %v1440, %v1443
      %vm1447 = vcmp.ge.f32.partialorder %v1445, 0.0
      %vm1448 = vcmp.ge.f32.partialorder %v1446, 0.0
      %v1449 = vmul.f32 %v1445, 0.2
      %v1450 = vmul.f32 %v1446, 0.2
      %v1451 = vsel %vm1447, %v1445, %v1449
      %v1452 = vsel %vm1448, %v1446, %v1450
      %v1453 = vpack.c.bf16 %v1452, %v1451
      %v1454 = vld [vmem:[%s7] sm:$0xf]
      %vm1455 = vcmask 130048
      %v1457 = vsel %vm1455, %v1454, 0
      %1459 = vmatpush.bf16.msra.mxu0 0
      %1460 = vmatpush.bf16.msra.mxu0 0
      %1461 = vmatpush.bf16.msra.mxu0 0
      %1462 = vmatpush.bf16.msra.mxu0 0
      %1463 = vmatpush.bf16.msra.mxu0 0
      %1464 = vmatpush.bf16.msra.mxu0 0
      %1465 = vmatpush.bf16.msra.mxu0 0
      %1466 = vmatpush.bf16.msra.mxu0 %v1453
      %1467 = vmatmul.bf16.gmra.mxu0 %v1457
      %v1468 = vpop.f32.mrf.mxu0
      %v1469 = vadd.f32 0.0, %v1468
      %v1470 = vpop.f32.mrf.mxu0
      %1471 = vdwg.mxu0
      %v1472 = vpack.c.bf16 %v1469, %v1469
      %v1473 = vld [vmem:[%s8] sm:$0xf]
      %v1474 = vld [vmem:[%s8 + $0x4] sm:$0xf]
      %v1475 = vld [vmem:[%s8 + $0x8] sm:$0xf]
      %v1476 = vld [vmem:[%s8 + $0xc] sm:$0xf]
      %v1477 = vld [vmem:[%s8 + $0x10] sm:$0xf]
      %v1478 = vld [vmem:[%s8 + $0x14] sm:$0xf]
      %v1479 = vld [vmem:[%s8 + $0x18] sm:$0xf]
      %v1480 = vld [vmem:[%s8 + $0x1c] sm:$0xf]
      %v1481 = vld [vmem:[%s8 + $0x20] sm:$0xf]
      %v1482 = vld [vmem:[%s8 + $0x24] sm:$0xf]
      %v1483 = vld [vmem:[%s8 + $0x28] sm:$0xf]
      %v1484 = vld [vmem:[%s8 + $0x2c] sm:$0xf]
      %v1485 = vld [vmem:[%s8 + $0x30] sm:$0xf]
      %v1486 = vld [vmem:[%s8 + $0x34] sm:$0xf]
      %v1487 = vld [vmem:[%s8 + $0x38] sm:$0xf]
      %v1488 = vld [vmem:[%s8 + $0x3c] sm:$0xf]
      %s1489 = scalar_lea.vmem %s7, 4
      %v1490 = vld [vmem:[%s1489] sm:$0xf]
      %v1492 = vsel %vm1455, %v1490, 0
      %1494 = vmatpush.bf16.msra.mxu0 0
      %1495 = vmatpush.bf16.msra.mxu0 0
      %1496 = vmatpush.bf16.msra.mxu0 0
      %1497 = vmatpush.bf16.msra.mxu0 0
      %1498 = vmatpush.bf16.msra.mxu0 0
      %1499 = vmatpush.bf16.msra.mxu0 0
      %1500 = vmatpush.bf16.msra.mxu0 0
      %1501 = vmatpush.bf16.msra.mxu0 %v1453
      %1502 = vmatmul.bf16.gmra.mxu0 %v1492
      %v1503 = vpop.f32.mrf.mxu0
      %v1504 = vadd.f32 0.0, %v1503
      %v1505 = vpop.f32.mrf.mxu0
      %1506 = vdwg.mxu0
      %v1507 = vpack.c.bf16 %v1504, %v1504
      %s1508 = scalar_lea.vmem %s8, 64
      %v1509 = vld [vmem:[%s1508] sm:$0xf]
      %v1510 = vld [vmem:[%s1508 + $0x4] sm:$0xf]
      %v1511 = vld [vmem:[%s1508 + $0x8] sm:$0xf]
      %v1512 = vld [vmem:[%s1508 + $0xc] sm:$0xf]
      %v1513 = vld [vmem:[%s1508 + $0x10] sm:$0xf]
      %v1514 = vld [vmem:[%s1508 + $0x14] sm:$0xf]
      %v1515 = vld [vmem:[%s1508 + $0x18] sm:$0xf]
      %v1516 = vld [vmem:[%s1508 + $0x1c] sm:$0xf]
      %v1517 = vld [vmem:[%s1508 + $0x20] sm:$0xf]
      %v1518 = vld [vmem:[%s1508 + $0x24] sm:$0xf]
      %v1519 = vld [vmem:[%s1508 + $0x28] sm:$0xf]
      %v1520 = vld [vmem:[%s1508 + $0x2c] sm:$0xf]
      %v1521 = vld [vmem:[%s1508 + $0x30] sm:$0xf]
      %v1522 = vld [vmem:[%s1508 + $0x34] sm:$0xf]
      %v1523 = vld [vmem:[%s1508 + $0x38] sm:$0xf]
      %v1524 = vld [vmem:[%s1508 + $0x3c] sm:$0xf]
      %v1541 = vunpack.c.l.b16 %v1509
      %v1542 = vunpack.c.l.b16 %v1510
      %v1543 = vunpack.c.l.b16 %v1511
      %v1544 = vunpack.c.l.b16 %v1512
      %v1545 = vunpack.c.l.b16 %v1513
      %v1546 = vunpack.c.l.b16 %v1514
      %v1547 = vunpack.c.l.b16 %v1515
      %v1548 = vunpack.c.l.b16 %v1516
      %v1549 = vunpack.c.l.b16 %v1517
      %v1550 = vunpack.c.l.b16 %v1518
      %v1551 = vunpack.c.l.b16 %v1519
      %v1552 = vunpack.c.l.b16 %v1520
      %v1553 = vunpack.c.l.b16 %v1521
      %v1554 = vunpack.c.l.b16 %v1522
      %v1555 = vunpack.c.l.b16 %v1523
      %v1556 = vunpack.c.l.b16 %v1524
      %v1557 = vpack.c.b16 %v1542, %v1541
      %v1558 = vpack.c.b16 %v1544, %v1543
      %v1559 = vpack.c.b16 %v1546, %v1545
      %v1560 = vpack.c.b16 %v1548, %v1547
      %v1561 = vpack.c.b16 %v1550, %v1549
      %v1562 = vpack.c.b16 %v1552, %v1551
      %v1563 = vpack.c.b16 %v1554, %v1553
      %v1564 = vpack.c.b16 %v1556, %v1555
      %1573 = vmatpush.bf16.msra.mxu0 %v1564
      %1574 = vmatpush.bf16.msra.mxu0 %v1563
      %1575 = vmatpush.bf16.msra.mxu0 %v1562
      %1576 = vmatpush.bf16.msra.mxu0 %v1561
      %1577 = vmatpush.bf16.msra.mxu0 %v1560
      %1578 = vmatpush.bf16.msra.mxu0 %v1559
      %1579 = vmatpush.bf16.msra.mxu0 %v1558
      %1580 = vmatpush.bf16.msra.mxu0 %v1557
      %1581 = vmatmul.bf16.gmra.mxu0 %v1507
      %v1582 = vpop.f32.mrf.mxu0
      %v1583 = vadd.f32 0.0, %v1582
      %v1584 = vpop.f32.mrf.mxu0
      %1585 = vdwg.mxu0
      %v1602 = vunpack.c.l.b16 %v1473
      %v1603 = vunpack.c.l.b16 %v1474
      %v1604 = vunpack.c.l.b16 %v1475
      %v1605 = vunpack.c.l.b16 %v1476
      %v1606 = vunpack.c.l.b16 %v1477
      %v1607 = vunpack.c.l.b16 %v1478
      %v1608 = vunpack.c.l.b16 %v1479
      %v1609 = vunpack.c.l.b16 %v1480
      %v1610 = vunpack.c.l.b16 %v1481
      %v1611 = vunpack.c.l.b16 %v1482
      %v1612 = vunpack.c.l.b16 %v1483
      %v1613 = vunpack.c.l.b16 %v1484
      %v1614 = vunpack.c.l.b16 %v1485
      %v1615 = vunpack.c.l.b16 %v1486
      %v1616 = vunpack.c.l.b16 %v1487
      %v1617 = vunpack.c.l.b16 %v1488
      %v1618 = vpack.c.b16 %v1603, %v1602
      %v1619 = vpack.c.b16 %v1605, %v1604
      %v1620 = vpack.c.b16 %v1607, %v1606
      %v1621 = vpack.c.b16 %v1609, %v1608
      %v1622 = vpack.c.b16 %v1611, %v1610
      %v1623 = vpack.c.b16 %v1613, %v1612
      %v1624 = vpack.c.b16 %v1615, %v1614
      %v1625 = vpack.c.b16 %v1617, %v1616
      %1634 = vmatpush.bf16.msra.mxu0 %v1625
      %1635 = vmatpush.bf16.msra.mxu0 %v1624
      %1636 = vmatpush.bf16.msra.mxu0 %v1623
      %1637 = vmatpush.bf16.msra.mxu0 %v1622
      %1638 = vmatpush.bf16.msra.mxu0 %v1621
      %1639 = vmatpush.bf16.msra.mxu0 %v1620
      %1640 = vmatpush.bf16.msra.mxu0 %v1619
      %1641 = vmatpush.bf16.msra.mxu0 %v1618
      %1642 = vmatmul.bf16.gmra.mxu0 %v1472
      %v1643 = vpop.f32.mrf.mxu0
      %v1644 = vadd.f32 %v1583, %v1643
      %v1645 = vpop.f32.mrf.mxu0
      %1646 = vdwg.mxu0
      %s1647 = scalar_lea.vmem %s7, 8
      %v1648 = vld [vmem:[%s1647] sm:$0xf]
      %v1650 = vsel %vm1455, %v1648, 0
      %1652 = vmatpush.bf16.msra.mxu0 0
      %1653 = vmatpush.bf16.msra.mxu0 0
      %1654 = vmatpush.bf16.msra.mxu0 0
      %1655 = vmatpush.bf16.msra.mxu0 0
      %1656 = vmatpush.bf16.msra.mxu0 0
      %1657 = vmatpush.bf16.msra.mxu0 0
      %1658 = vmatpush.bf16.msra.mxu0 0
      %1659 = vmatpush.bf16.msra.mxu0 %v1453
      %1660 = vmatmul.bf16.gmra.mxu0 %v1650
      %v1661 = vpop.f32.mrf.mxu0
      %v1662 = vadd.f32 0.0, %v1661
      %v1663 = vpop.f32.mrf.mxu0
      %1664 = vdwg.mxu0
      %v1665 = vpack.c.bf16 %v1662, %v1662
      %s1666 = scalar_lea.vmem %s8, 128
      %v1667 = vld [vmem:[%s1666] sm:$0xf]
      %v1668 = vld [vmem:[%s1666 + $0x4] sm:$0xf]
      %v1669 = vld [vmem:[%s1666 + $0x8] sm:$0xf]
      %v1670 = vld [vmem:[%s1666 + $0xc] sm:$0xf]
      %v1671 = vld [vmem:[%s1666 + $0x10] sm:$0xf]
      %v1672 = vld [vmem:[%s1666 + $0x14] sm:$0xf]
      %v1673 = vld [vmem:[%s1666 + $0x18] sm:$0xf]
      %v1674 = vld [vmem:[%s1666 + $0x1c] sm:$0xf]
      %v1675 = vld [vmem:[%s1666 + $0x20] sm:$0xf]
      %v1676 = vld [vmem:[%s1666 + $0x24] sm:$0xf]
      %v1677 = vld [vmem:[%s1666 + $0x28] sm:$0xf]
      %v1678 = vld [vmem:[%s1666 + $0x2c] sm:$0xf]
      %v1679 = vld [vmem:[%s1666 + $0x30] sm:$0xf]
      %v1680 = vld [vmem:[%s1666 + $0x34] sm:$0xf]
      %v1681 = vld [vmem:[%s1666 + $0x38] sm:$0xf]
      %v1682 = vld [vmem:[%s1666 + $0x3c] sm:$0xf]
      %v1699 = vunpack.c.l.b16 %v1667
      %v1700 = vunpack.c.l.b16 %v1668
      %v1701 = vunpack.c.l.b16 %v1669
      %v1702 = vunpack.c.l.b16 %v1670
      %v1703 = vunpack.c.l.b16 %v1671
      %v1704 = vunpack.c.l.b16 %v1672
      %v1705 = vunpack.c.l.b16 %v1673
      %v1706 = vunpack.c.l.b16 %v1674
      %v1707 = vunpack.c.l.b16 %v1675
      %v1708 = vunpack.c.l.b16 %v1676
      %v1709 = vunpack.c.l.b16 %v1677
      %v1710 = vunpack.c.l.b16 %v1678
      %v1711 = vunpack.c.l.b16 %v1679
      %v1712 = vunpack.c.l.b16 %v1680
      %v1713 = vunpack.c.l.b16 %v1681
      %v1714 = vunpack.c.l.b16 %v1682
      %v1715 = vpack.c.b16 %v1700, %v1699
      %v1716 = vpack.c.b16 %v1702, %v1701
      %v1717 = vpack.c.b16 %v1704, %v1703
      %v1718 = vpack.c.b16 %v1706, %v1705
      %v1719 = vpack.c.b16 %v1708, %v1707
      %v1720 = vpack.c.b16 %v1710, %v1709
      %v1721 = vpack.c.b16 %v1712, %v1711
      %v1722 = vpack.c.b16 %v1714, %v1713
      %1731 = vmatpush.bf16.msra.mxu0 %v1722
      %1732 = vmatpush.bf16.msra.mxu0 %v1721
      %1733 = vmatpush.bf16.msra.mxu0 %v1720
      %1734 = vmatpush.bf16.msra.mxu0 %v1719
      %1735 = vmatpush.bf16.msra.mxu0 %v1718
      %1736 = vmatpush.bf16.msra.mxu0 %v1717
      %1737 = vmatpush.bf16.msra.mxu0 %v1716
      %1738 = vmatpush.bf16.msra.mxu0 %v1715
      %1739 = vmatmul.bf16.gmra.mxu0 %v1665
      %v1740 = vpop.f32.mrf.mxu0
      %v1741 = vadd.f32 0.0, %v1740
      %v1742 = vpop.f32.mrf.mxu0
      %1743 = vdwg.mxu0
      %v1744 = vadd.f32 %v1644, %v1741
      %v1745 = vld [vmem:[%s9] sm:$0x1]
      %v1747 = vperm.slane %v1745, 0
      %v1749 = vadd.f32 %v1744, %v1747
      %vm1750 = vcmp.ge.f32.partialorder %v1749, 0.0
      %v1751 = vmul.f32 %v1749, 0.2
      %v1752 = vsel %vm1750, %v1749, %v1751
      %v1753 = vpack.c.bf16 %v1752, %v1752
      %v1754 = vld [vmem:[%s10] sm:$0x3]
      %vm1755 = vcmask 64512
      %v1757 = vsel %vm1755, %v1754, 0
      %vm1759 = vcmask 1043456
      %v1761 = vsel %vm1759, %v1753, 0
      %1763 = vmatpush.bf16.msra.mxu0 0
      %1764 = vmatpush.bf16.msra.mxu0 0
      %1765 = vmatpush.bf16.msra.mxu0 0
      %1766 = vmatpush.bf16.msra.mxu0 0
      %1767 = vmatpush.bf16.msra.mxu0 0
      %1768 = vmatpush.bf16.msra.mxu0 0
      %1769 = vmatpush.bf16.msra.mxu0 0
      %1770 = vmatpush.bf16.msra.mxu0 %v1761
      %1771 = vmatmul.bf16.gmra.mxu0 %v1757
      %v1772 = vpop.f32.mrf.mxu0
      %v1773 = vadd.f32 0.0, %v1772
      %v1774 = vpop.f32.mrf.mxu0
      %1775 = vdwg.mxu0
      %v1776 = vpack.c.bf16 %v1773, %v1773
      %v1777 = vld [vmem:[%s11] sm:$0xf]
      %v1778 = vld [vmem:[%s11 + $0x4] sm:$0xf]
      %v1779 = vld [vmem:[%s11 + $0x8] sm:$0xf]
      %v1780 = vld [vmem:[%s11 + $0xc] sm:$0xf]
      %v1781 = vld [vmem:[%s11 + $0x10] sm:$0xf]
      %v1782 = vld [vmem:[%s11 + $0x14] sm:$0xf]
      %v1783 = vld [vmem:[%s11 + $0x18] sm:$0xf]
      %v1784 = vld [vmem:[%s11 + $0x1c] sm:$0xf]
      %v1785 = vld [vmem:[%s11 + $0x20] sm:$0xf]
      %v1786 = vld [vmem:[%s11 + $0x24] sm:$0xf]
      %v1787 = vld [vmem:[%s11 + $0x28] sm:$0xf]
      %v1788 = vld [vmem:[%s11 + $0x2c] sm:$0xf]
      %v1789 = vld [vmem:[%s11 + $0x30] sm:$0xf]
      %v1790 = vld [vmem:[%s11 + $0x34] sm:$0xf]
      %v1791 = vld [vmem:[%s11 + $0x38] sm:$0xf]
      %v1792 = vld [vmem:[%s11 + $0x3c] sm:$0xf]
      %s1793 = scalar_lea.vmem %s10, 2
      %v1794 = vld [vmem:[%s1793] sm:$0x3]
      %v1796 = vsel %vm1755, %v1794, 0
      %1798 = vmatpush.bf16.msra.mxu0 0
      %1799 = vmatpush.bf16.msra.mxu0 0
      %1800 = vmatpush.bf16.msra.mxu0 0
      %1801 = vmatpush.bf16.msra.mxu0 0
      %1802 = vmatpush.bf16.msra.mxu0 0
      %1803 = vmatpush.bf16.msra.mxu0 0
      %1804 = vmatpush.bf16.msra.mxu0 0
      %1805 = vmatpush.bf16.msra.mxu0 %v1761
      %1806 = vmatmul.bf16.gmra.mxu0 %v1796
      %v1807 = vpop.f32.mrf.mxu0
      %v1808 = vadd.f32 0.0, %v1807
      %v1809 = vpop.f32.mrf.mxu0
      %1810 = vdwg.mxu0
      %v1811 = vpack.c.bf16 %v1808, %v1808
      %s1812 = scalar_lea.vmem %s11, 64
      %v1813 = vld [vmem:[%s1812] sm:$0xf]
      %v1814 = vld [vmem:[%s1812 + $0x4] sm:$0xf]
      %v1815 = vld [vmem:[%s1812 + $0x8] sm:$0xf]
      %v1816 = vld [vmem:[%s1812 + $0xc] sm:$0xf]
      %v1817 = vld [vmem:[%s1812 + $0x10] sm:$0xf]
      %v1818 = vld [vmem:[%s1812 + $0x14] sm:$0xf]
      %v1819 = vld [vmem:[%s1812 + $0x18] sm:$0xf]
      %v1820 = vld [vmem:[%s1812 + $0x1c] sm:$0xf]
      %v1821 = vld [vmem:[%s1812 + $0x20] sm:$0xf]
      %v1822 = vld [vmem:[%s1812 + $0x24] sm:$0xf]
      %v1823 = vld [vmem:[%s1812 + $0x28] sm:$0xf]
      %v1824 = vld [vmem:[%s1812 + $0x2c] sm:$0xf]
      %v1825 = vld [vmem:[%s1812 + $0x30] sm:$0xf]
      %v1826 = vld [vmem:[%s1812 + $0x34] sm:$0xf]
      %v1827 = vld [vmem:[%s1812 + $0x38] sm:$0xf]
      %v1828 = vld [vmem:[%s1812 + $0x3c] sm:$0xf]
      %v1845 = vunpack.c.l.b16 %v1813
      %v1846 = vunpack.c.l.b16 %v1814
      %v1847 = vunpack.c.l.b16 %v1815
      %v1848 = vunpack.c.l.b16 %v1816
      %v1849 = vunpack.c.l.b16 %v1817
      %v1850 = vunpack.c.l.b16 %v1818
      %v1851 = vunpack.c.l.b16 %v1819
      %v1852 = vunpack.c.l.b16 %v1820
      %v1853 = vunpack.c.l.b16 %v1821
      %v1854 = vunpack.c.l.b16 %v1822
      %v1855 = vunpack.c.l.b16 %v1823
      %v1856 = vunpack.c.l.b16 %v1824
      %v1857 = vunpack.c.l.b16 %v1825
      %v1858 = vunpack.c.l.b16 %v1826
      %v1859 = vunpack.c.l.b16 %v1827
      %v1860 = vunpack.c.l.b16 %v1828
      %v1861 = vpack.c.b16 %v1846, %v1845
      %v1862 = vpack.c.b16 %v1848, %v1847
      %v1863 = vpack.c.b16 %v1850, %v1849
      %v1864 = vpack.c.b16 %v1852, %v1851
      %v1865 = vpack.c.b16 %v1854, %v1853
      %v1866 = vpack.c.b16 %v1856, %v1855
      %v1867 = vpack.c.b16 %v1858, %v1857
      %v1868 = vpack.c.b16 %v1860, %v1859
      %1877 = vmatpush.bf16.msra.mxu0 %v1868
      %1878 = vmatpush.bf16.msra.mxu0 %v1867
      %1879 = vmatpush.bf16.msra.mxu0 %v1866
      %1880 = vmatpush.bf16.msra.mxu0 %v1865
      %1881 = vmatpush.bf16.msra.mxu0 %v1864
      %1882 = vmatpush.bf16.msra.mxu0 %v1863
      %1883 = vmatpush.bf16.msra.mxu0 %v1862
      %1884 = vmatpush.bf16.msra.mxu0 %v1861
      %1885 = vmatmul.bf16.gmra.mxu0 %v1811
      %v1886 = vpop.f32.mrf.mxu0
      %v1887 = vadd.f32 0.0, %v1886
      %v1888 = vpop.f32.mrf.mxu0
      %1889 = vdwg.mxu0
      %v1906 = vunpack.c.l.b16 %v1777
      %v1907 = vunpack.c.l.b16 %v1778
      %v1908 = vunpack.c.l.b16 %v1779
      %v1909 = vunpack.c.l.b16 %v1780
      %v1910 = vunpack.c.l.b16 %v1781
      %v1911 = vunpack.c.l.b16 %v1782
      %v1912 = vunpack.c.l.b16 %v1783
      %v1913 = vunpack.c.l.b16 %v1784
      %v1914 = vunpack.c.l.b16 %v1785
      %v1915 = vunpack.c.l.b16 %v1786
      %v1916 = vunpack.c.l.b16 %v1787
      %v1917 = vunpack.c.l.b16 %v1788
      %v1918 = vunpack.c.l.b16 %v1789
      %v1919 = vunpack.c.l.b16 %v1790
      %v1920 = vunpack.c.l.b16 %v1791
      %v1921 = vunpack.c.l.b16 %v1792
      %v1922 = vpack.c.b16 %v1907, %v1906
      %v1923 = vpack.c.b16 %v1909, %v1908
      %v1924 = vpack.c.b16 %v1911, %v1910
      %v1925 = vpack.c.b16 %v1913, %v1912
      %v1926 = vpack.c.b16 %v1915, %v1914
      %v1927 = vpack.c.b16 %v1917, %v1916
      %v1928 = vpack.c.b16 %v1919, %v1918
      %v1929 = vpack.c.b16 %v1921, %v1920
      %1938 = vmatpush.bf16.msra.mxu0 %v1929
      %1939 = vmatpush.bf16.msra.mxu0 %v1928
      %1940 = vmatpush.bf16.msra.mxu0 %v1927
      %1941 = vmatpush.bf16.msra.mxu0 %v1926
      %1942 = vmatpush.bf16.msra.mxu0 %v1925
      %1943 = vmatpush.bf16.msra.mxu0 %v1924
      %1944 = vmatpush.bf16.msra.mxu0 %v1923
      %1945 = vmatpush.bf16.msra.mxu0 %v1922
      %1946 = vmatmul.bf16.gmra.mxu0 %v1776
      %v1947 = vpop.f32.mrf.mxu0
      %v1948 = vadd.f32 %v1887, %v1947
      %v1949 = vpop.f32.mrf.mxu0
      %1950 = vdwg.mxu0
      %s1951 = scalar_lea.vmem %s10, 4
      %v1952 = vld [vmem:[%s1951] sm:$0x3]
      %v1954 = vsel %vm1755, %v1952, 0
      %1956 = vmatpush.bf16.msra.mxu0 0
      %1957 = vmatpush.bf16.msra.mxu0 0
      %1958 = vmatpush.bf16.msra.mxu0 0
      %1959 = vmatpush.bf16.msra.mxu0 0
      %1960 = vmatpush.bf16.msra.mxu0 0
      %1961 = vmatpush.bf16.msra.mxu0 0
      %1962 = vmatpush.bf16.msra.mxu0 0
      %1963 = vmatpush.bf16.msra.mxu0 %v1761
      %1964 = vmatmul.bf16.gmra.mxu0 %v1954
      %v1965 = vpop.f32.mrf.mxu0
      %v1966 = vadd.f32 0.0, %v1965
      %v1967 = vpop.f32.mrf.mxu0
      %1968 = vdwg.mxu0
      %v1969 = vpack.c.bf16 %v1966, %v1966
      %s1970 = scalar_lea.vmem %s11, 128
      %v1971 = vld [vmem:[%s1970] sm:$0xf]
      %v1972 = vld [vmem:[%s1970 + $0x4] sm:$0xf]
      %v1973 = vld [vmem:[%s1970 + $0x8] sm:$0xf]
      %v1974 = vld [vmem:[%s1970 + $0xc] sm:$0xf]
      %v1975 = vld [vmem:[%s1970 + $0x10] sm:$0xf]
      %v1976 = vld [vmem:[%s1970 + $0x14] sm:$0xf]
      %v1977 = vld [vmem:[%s1970 + $0x18] sm:$0xf]
      %v1978 = vld [vmem:[%s1970 + $0x1c] sm:$0xf]
      %v1979 = vld [vmem:[%s1970 + $0x20] sm:$0xf]
      %v1980 = vld [vmem:[%s1970 + $0x24] sm:$0xf]
      %v1981 = vld [vmem:[%s1970 + $0x28] sm:$0xf]
      %v1982 = vld [vmem:[%s1970 + $0x2c] sm:$0xf]
      %v1983 = vld [vmem:[%s1970 + $0x30] sm:$0xf]
      %v1984 = vld [vmem:[%s1970 + $0x34] sm:$0xf]
      %v1985 = vld [vmem:[%s1970 + $0x38] sm:$0xf]
      %v1986 = vld [vmem:[%s1970 + $0x3c] sm:$0xf]
      %v2003 = vunpack.c.l.b16 %v1971
      %v2004 = vunpack.c.l.b16 %v1972
      %v2005 = vunpack.c.l.b16 %v1973
      %v2006 = vunpack.c.l.b16 %v1974
      %v2007 = vunpack.c.l.b16 %v1975
      %v2008 = vunpack.c.l.b16 %v1976
      %v2009 = vunpack.c.l.b16 %v1977
      %v2010 = vunpack.c.l.b16 %v1978
      %v2011 = vunpack.c.l.b16 %v1979
      %v2012 = vunpack.c.l.b16 %v1980
      %v2013 = vunpack.c.l.b16 %v1981
      %v2014 = vunpack.c.l.b16 %v1982
      %v2015 = vunpack.c.l.b16 %v1983
      %v2016 = vunpack.c.l.b16 %v1984
      %v2017 = vunpack.c.l.b16 %v1985
      %v2018 = vunpack.c.l.b16 %v1986
      %v2019 = vpack.c.b16 %v2004, %v2003
      %v2020 = vpack.c.b16 %v2006, %v2005
      %v2021 = vpack.c.b16 %v2008, %v2007
      %v2022 = vpack.c.b16 %v2010, %v2009
      %v2023 = vpack.c.b16 %v2012, %v2011
      %v2024 = vpack.c.b16 %v2014, %v2013
      %v2025 = vpack.c.b16 %v2016, %v2015
      %v2026 = vpack.c.b16 %v2018, %v2017
      %2035 = vmatpush.bf16.msra.mxu0 %v2026
      %2036 = vmatpush.bf16.msra.mxu0 %v2025
      %2037 = vmatpush.bf16.msra.mxu0 %v2024
      %2038 = vmatpush.bf16.msra.mxu0 %v2023
      %2039 = vmatpush.bf16.msra.mxu0 %v2022
      %2040 = vmatpush.bf16.msra.mxu0 %v2021
      %2041 = vmatpush.bf16.msra.mxu0 %v2020
      %2042 = vmatpush.bf16.msra.mxu0 %v2019
      %2043 = vmatmul.bf16.gmra.mxu0 %v1969
      %v2044 = vpop.f32.mrf.mxu0
      %v2045 = vadd.f32 0.0, %v2044
      %v2046 = vpop.f32.mrf.mxu0
      %2047 = vdwg.mxu0
      %v2048 = vadd.f32 %v1948, %v2045
      %v2049 = vld [vmem:[%s12] sm:$0x1]
      %v2051 = vperm.slane %v2049, 0
      %v2053 = vadd.f32 %v2048, %v2051
      %v2054 = vxor.u32 %v2053, 2147483648
      %v2055 = vmul.f32 %v2054, 1.442695
      %v2056 = vpow.pop %v2055
      %v2057 = vadd.f32 %v2056, 1.0
      %v2058 = vrcp.pop %v2057
      %v2059 = vmul.f32 %v2057, %v2058
      %v2060 = vsub.f32 1.0, %v2059
      %v2061 = vmul.f32 %v2058, %v2060
      %v2062 = vadd.f32 %v2058, %v2061
      %vm2063 = vweird.f32 %v2057
      %vm2064 = vweird.f32 %v2058
      %vm2065 = vmor %vm2063, %vm2064
      %v2066 = vsel %vm2065, %v2058, %v2062
      %v2067 = vand.u32 2147483647, %v2057
      %vm2068 = vcmp.eq.f32.partialorder %v2067, 8.507059e+37
      %v2069 = vand.u32 %v2057, 2147483648
      %v2070 = vor.u32 1.1754944e-38, %v2069
      %v2071 = vsel %vm2068, %v2070, %v2066
      %v2072 = vmul.f32 1.0, %v2071
      %vm2073 = vcmask 519168
      %2074 = vst.msk [vmem:[%s438] sm:$0xf] %vm2073, %v2072
      %p2075 = scmp.lt.s32.totalorder %s24, 1
      %s2076 = scalar_select %p2075, %s24, 1
      %s2077 = smul.addr %s2076, 4
      %s2078 = scalar_lea.vmem %s13, %s2077
      // Predicated region
      $region73: #{discriminator_forward.1} parent=71 // pred_check
        %p2079 = pneg %p320
      $region74: #{discriminator_forward.1} parent=71 // pred_check_branch
        %2081 = sbr.rel (%p2079) target = $region76
      $region75: #{discriminator_forward.1} parent=71 // pred_region
        _
      $region76: #{discriminator_forward.1} parent=71 // pred_fallthru
        _
    $region72: #{discriminator_forward.1} parent=5 // pred_fallthru
      _
    %p2082 = scmp.le.s32.totalorder 2, %s19
    // Predicated region
    $region77: #{discriminator_forward.1} parent=5 // pred_check
      %p2083 = pneg %p2082
    $region78: #{discriminator_forward.1} parent=5 // pred_check_branch
      %2085 = sbr.rel (%p2083) target = $region80
    $region79: #{discriminator_forward.1} parent=5 // pred_region
      %s2086 = ssub.s32 %s19, 2
      // Predicated region
      $region81: #{discriminator_forward.1} parent=79 // pred_check
        %p2087 = pneg %p326
      $region82: #{discriminator_forward.1} parent=79 // pred_check_branch
        %2089 = sbr.rel (%p2087) target = $region84
      $region83: #{discriminator_forward.1} parent=79 // pred_region
        %p2090 = scmp.lt.s32.totalorder %s25, 1
        %s2091 = scalar_select %p2090, %s25, 1
        %s2092 = smul.addr %s2091, 4
        %s2093 = scalar_lea.vmem %s13, %s2092
      $region84: #{discriminator_forward.1} parent=79 // pred_fallthru
        _
    $region80: #{discriminator_forward.1} parent=5 // pred_fallthru
      _
  $region6: #{discriminator_forward.1} parent=0 // loop_footer
    %s23 = sadd.s32 1, %s19
  $region7: #{discriminator_forward.1} parent=0 // loop_footer_branch
    %18 = sbr.rel target = $region3
  $region8: #{discriminator_forward.1} parent=0 // loop_exit
    _

</llo_original>
